<compile_context>
chip_gen: v6e
topology: v6e:2x2x1
jax: 0.10.0
libtpu: 0.0.40
codegen_flags: <defaults>
</compile_context>

<pallas_src>
import math
from functools import partial

import jax
import jax.numpy as jnp
from jax import lax
from jax.experimental import pallas as pl
from jax.experimental.pallas import tpu as pltpu

EPS = 1e-6
NEG_INF = -1e30

_VMEM_LIMIT = None


def _vmem_limit_bytes():
    """Per-generation scoped-VMEM budget: ~3/4 of physical VMEM (headroom for
    compiler-internal scratch and double buffers). v5e/v6e -> 96 MiB, v7x -> 48 MiB."""
    global _VMEM_LIMIT
    if _VMEM_LIMIT is None:
        limit = 64 * 1024 * 1024          # conservative fallback
        try:
            cap = int(pltpu.get_tpu_info().vmem_capacity_bytes)
            limit = max(32 * 1024 * 1024, (cap * 3) // 4)
        except Exception:
            pass
        _VMEM_LIMIT = limit
    return _VMEM_LIMIT


def _round_up(x, m):
    return ((x + m - 1) // m) * m


def _q_tiling(T):
    """(query tile, padded length). Padded length is a multiple of the tile."""
    t8 = _round_up(T, 8)
    if t8 <= 128:
        return t8, t8
    if t8 % 128 == 0:
        return 128, t8
    return 128, _round_up(T, 128)


def _f_tiling(F, max_chunk=1024):
    """Chunk size for streaming the FFN hidden (ff) dimension of W1/W2."""
    if F <= max_chunk:
        return F
    for tf in (max_chunk, 512, 256, 128):
        if F % tf == 0:
            return tf
    return F  # fall back to fully-resident weights


# --------------------------------- kernels ----------------------------------

def _layer_norm_f32(y, g, b):
    mu = jnp.mean(y, axis=-1, keepdims=True)
    var = jnp.mean(jnp.square(y - mu), axis=-1, keepdims=True)
    return (y - mu) * lax.rsqrt(var + EPS) * g + b


def _make_attn_ln_kernel(*, num_heads, head_size, alpha, causal, has_mask, cdt):
    """out = LayerNorm(MHA(q, kv, kv, mask) + alpha * q)  (post-norm, eval)."""

    def kernel(*refs):
        it = iter(refs)
        q_ref = next(it)                      # (1, tq, D) query tile == residual
        kv_ref = next(it)                     # (1, Tk, D) full key/value sequence
        mask_ref = next(it) if has_mask else None
        wq_ref, bq_ref = next(it), next(it)   # (D, D), (1, D)  (scale folded in)
        wk_ref, bk_ref = next(it), next(it)
        wv_ref, bv_ref = next(it), next(it)
        wo_ref, bo_ref = next(it), next(it)
        g_ref, beta_ref = next(it), next(it)
        out_ref = next(it)
        k_scr, v_scr, ctx_scr = next(it), next(it), next(it)

        qi = pl.program_id(1)
        tq = q_ref.shape[1]
        Tk = kv_ref.shape[1]

        # K/V projected once per batch element and reused for every query tile.
        @pl.when(qi == 0)
        def _():
            xkv = kv_ref[0].astype(cdt)                                # (Tk, D)
            k_scr[...] = (jnp.dot(xkv, wk_ref[...],
                                  preferred_element_type=jnp.float32)
                          + bk_ref[0]).astype(cdt)
            v_scr[...] = (jnp.dot(xkv, wv_ref[...],
                                  preferred_element_type=jnp.float32)
                          + bv_ref[0]).astype(cdt)

        # Full-width (tq, D)x(D, D) query projection (1/sqrt(hd) folded in).
        xq_f = q_ref[0].astype(jnp.float32)
        q_full = (jnp.dot(xq_f.astype(cdt), wq_ref[...],
                          preferred_element_type=jnp.float32)
                  + bq_ref[0]).astype(cdt)                              # (tq, D)

        # Mask -> additive bias, hoisted out of the head loop.
        if causal:
            q_idx = qi * tq + lax.broadcasted_iota(jnp.int32, (tq, Tk), 0)
            k_idx = lax.broadcasted_iota(jnp.int32, (tq, Tk), 1)
            neg = jnp.where(k_idx <= q_idx, 0.0, NEG_INF).astype(jnp.float32)
        else:
            neg = jnp.where(mask_ref[0] != 0, 0.0, NEG_INF).astype(jnp.float32)

        # Per-head attention; contexts written into the (tq, D) scratch so one
        # full-width output projection can follow.  Static unroll: only one
        # head's (tq, Tk) scores are live at a time (stores to ctx_scr sequence
        # the loop).
        # TODO(synk): for very long Tk, switch to a Tk-tiled online softmax
        # (flash-style m/l/acc scratch) so residency stops scaling with Tk.
        for h in range(num_heads):
            sl = slice(h * head_size, (h + 1) * head_size)
            s = lax.dot_general(q_full[:, sl], k_scr[:, sl],
                                (((1,), (1,)), ((), ())),
                                preferred_element_type=jnp.float32)     # (tq, Tk)
            s = s + neg
            s = s - jnp.max(s, axis=-1, keepdims=True)
            e = jnp.exp(s)
            p = e * pl.reciprocal(jnp.sum(e, axis=-1, keepdims=True), approx=True)
            # TODO(synk): attention dropout omitted (eval mode / deterministic).
            ctx_scr[:, sl] = jnp.dot(p.astype(cdt), v_scr[:, sl],
                                     preferred_element_type=jnp.float32).astype(cdt)

        # Single (tq, D)x(D, D) output projection + residual + LayerNorm.
        y = (jnp.dot(ctx_scr[...], wo_ref[...],
                     preferred_element_type=jnp.float32)
             + bo_ref[0] + alpha * xq_f)
        out_ref[0] = _layer_norm_f32(y, g_ref[0], beta_ref[0]).astype(out_ref.dtype)

    return kernel


def _ffn_ln_kernel(x_ref, w1_ref, b1_ref, w2_ref, b2_ref, g_ref, beta_ref,
                   out_ref, acc_ref, *, alpha, cdt):
    """out = LayerNorm(relu(x W1 + b1) W2 + b2 + alpha * x); W1/W2 streamed over F."""
    f = pl.program_id(2)

    @pl.when(f == 0)
    def _():
        acc_ref[...] = jnp.zeros_like(acc_ref)

    x = x_ref[0].astype(cdt)                                            # (tq, D)
    h = jnp.dot(x, w1_ref[...], preferred_element_type=jnp.float32) + b1_ref[0]
    h = jnp.maximum(h, 0.0)                                             # (tq, tf)
    acc_ref[...] += jnp.dot(h.astype(cdt), w2_ref[...],
                            preferred_element_type=jnp.float32)         # (tq, D)

    @pl.when(f == pl.num_programs(2) - 1)
    def _():
        y = acc_ref[...] + b2_ref[0] + alpha * x_ref[0].astype(jnp.float32)
        out_ref[0] = _layer_norm_f32(y, g_ref[0], beta_ref[0]).astype(out_ref.dtype)


# -------------------------------- wrappers ----------------------------------

# Grid-invariant operands (weights / biases / LN params): same block every
# step -> fetched once, never re-DMAed.
# TODO(synk): single-buffer these (pipeline_mode=pl.Buffered(1)) to halve their
# VMEM footprint on v7x once verified on the target jax version.
def _rep_spec2(shape):                      # 2-D grid (attention)
    assert len(shape) == 2
    return pl.BlockSpec(shape, lambda b, qi: (0, 0))


def _rep_spec3(shape):                      # 3-D grid (ffn)
    assert len(shape) == 2
    return pl.BlockSpec(shape, lambda b, qi, f: (0, 0))


def _prep_attn_weights(p, head_size, cdt):
    """Full-width (D, D) projections pre-transposed for x @ W; 1/sqrt(head_size)
    folded into the query projection."""
    scale = 1.0 / math.sqrt(head_size)
    wq = (p["wq"].T * scale).astype(cdt)
    wk = p["wk"].T.astype(cdt)
    wv = p["wv"].T.astype(cdt)
    wo = p["wo"].T.astype(cdt)
    bq = (p["bq"] * scale).astype(jnp.float32)
    bk = p["bk"].astype(jnp.float32)
    bv = p["bv"].astype(jnp.float32)
    bo = p["bo"].astype(jnp.float32)
    return wq, bq, wk, bk, wv, bv, wo, bo


def attn_ln_block(q_in, kv_in, mask, p, ln_g, ln_b, *, num_heads, alpha,
                  causal, out_dtype, cdt):
    """out = LayerNorm(MHA(q, kv, kv, mask) + alpha * q).

    q_in  : (B, Tq, D) query / residual stream (Tq divisible by the query tile)
    kv_in : (B, Tk, D) key/value stream
    mask  : (B, 1|Tq, Tk) int8 {0,1}, or None with causal=True (in-kernel mask)
    """
    B, Tq, D = q_in.shape
    Tk = kv_in.shape[1]
    head_size = D // num_heads
    tq, _ = _q_tiling(Tq)
    assert Tq % tq == 0
    nq = Tq // tq

    weights = list(_prep_attn_weights(p, head_size, cdt))
    weights += [ln_g.astype(jnp.float32), ln_b.astype(jnp.float32)]

    has_mask = mask is not None
    in_arrays = [q_in, kv_in]
    in_specs = [
        pl.BlockSpec((1, tq, D), lambda b, qi: (b, qi, 0)),   # query tile / residual
        pl.BlockSpec((1, Tk, D), lambda b, qi: (b, 0, 0)),    # full K/V sequence
    ]
    if has_mask:
        if mask.shape[1] == 1:            # compact padding mask [B, 1, Tk]
            in_specs.append(pl.BlockSpec((1, 1, Tk), lambda b, qi: (b, 0, 0)))
        else:                             # per-query mask [B, Tq, Tk]
            in_specs.append(pl.BlockSpec((1, tq, Tk), lambda b, qi: (b, qi, 0)))
        in_arrays.append(mask)
    in_arrays += weights
    in_specs += [_rep_spec2(w.shape) for w in weights]

    kernel = _make_attn_ln_kernel(num_heads=num_heads, head_size=head_size,
                                  alpha=alpha, causal=causal, has_mask=has_mask,
                                  cdt=cdt)
    return pl.pallas_call(
        kernel,
        out_shape=jax.ShapeDtypeStruct((B, Tq, D), out_dtype),
        grid=(B, nq),
        in_specs=in_specs,
        out_specs=pl.BlockSpec((1, tq, D), lambda b, qi: (b, qi, 0)),
        scratch_shapes=[pltpu.VMEM((Tk, D), cdt),    # K projection (per batch elem)
                        pltpu.VMEM((Tk, D), cdt),    # V projection
                        pltpu.VMEM((tq, D), cdt)],   # per-head context assembly
        compiler_params=pltpu.CompilerParams(
            # qi is 'arbitrary': the K/V scratch written at qi==0 is reused by
            # later query tiles of the same batch element.
            dimension_semantics=("parallel", "arbitrary"),
            vmem_limit_bytes=_vmem_limit_bytes()),
    )(*in_arrays)


def ffn_ln_block(x, p, *, alpha, out_dtype, cdt):
    B, T, D = x.shape
    tq, _ = _q_tiling(T)
    assert T % tq == 0
    nq = T // tq
    F = p["w1"].shape[0]
    tf = _f_tiling(F)
    nf = F // tf

    w1 = p["w1"].T.astype(cdt)                 # (D, F) pre-transposed
    w2 = p["w2"].T.astype(cdt)                 # (F, D)
    b1 = p["b1"].astype(jnp.float32)           # (1, F)
    b2 = p["b2"].astype(jnp.float32)           # (1, D)
    g = p["ln_g"].astype(jnp.float32)
    beta = p["ln_b"].astype(jnp.float32)

    kernel = partial(_ffn_ln_kernel, alpha=alpha, cdt=cdt)
    return pl.pallas_call(
        kernel,
        out_shape=jax.ShapeDtypeStruct((B, T, D), out_dtype),
        grid=(B, nq, nf),
        in_specs=[pl.BlockSpec((1, tq, D), lambda b, qi, f: (b, qi, 0)),
                  pl.BlockSpec((D, tf), lambda b, qi, f: (0, f)),   # W1 column block
                  pl.BlockSpec((1, tf), lambda b, qi, f: (0, f)),   # b1 chunk
                  pl.BlockSpec((tf, D), lambda b, qi, f: (f, 0)),   # W2 row block
                  _rep_spec3(b2.shape), _rep_spec3(g.shape), _rep_spec3(beta.shape)],
        out_specs=pl.BlockSpec((1, tq, D), lambda b, qi, f: (b, qi, 0)),
        scratch_shapes=[pltpu.VMEM((tq, D), jnp.float32)],          # y accumulator
        compiler_params=pltpu.CompilerParams(
            dimension_semantics=("parallel", "parallel", "arbitrary"),
            vmem_limit_bytes=_vmem_limit_bytes()),
    )(x, w1, b1, w2, b2, g, beta)


def transformer_decoder_layer(x, memory, src_mask, trg_mask, params, num_heads,
                              alpha=1.0, compute_dtype=jnp.bfloat16,
                              out_dtype=jnp.float32):
    """Post-layer-norm joeynmt TransformerDecoderLayer forward (eval mode).

    trg_mask: (B, 1|Tq, Tq) {0,1} mask, or None for a purely-causal target mask
              generated in-kernel (no O(B*T^2) mask materialized in HBM).
    src_mask: (B, 1, Tk) padding mask (kept compact, passed as int8).
    """
    B, Tq, D = x.shape
    tq, Tp = _q_tiling(Tq)

    # bf16 activations into the kernels (residual recomputed from the tile);
    # softmax / LayerNorm math stays f32 inside the kernels.
    x_c = x.astype(compute_dtype)
    mem = memory.astype(compute_dtype)

    # Pad only the query/grid-tiled dimension; K/V streams stay unpadded so no
    # fake keys are introduced. Padded query rows are dropped at the end.
    xq = x_c if Tp == Tq else jnp.pad(x_c, ((0, 0), (0, Tp - Tq), (0, 0)))

    if trg_mask is None:
        trg_m = None                       # in-kernel causal mask
    else:
        trg_m = trg_mask.astype(jnp.int8)  # compact int8, no f32 broadcast
        if trg_m.shape[1] != 1 and Tp != Tq:
            trg_m = jnp.pad(trg_m, ((0, 0), (0, Tp - Tq), (0, 0)))
    src_m = src_mask.astype(jnp.int8)

    # 1) target-target self-attention + residual + LayerNorm (fused)
    h1 = attn_ln_block(xq, x_c, trg_m, params["self_att"],
                       params["x_ln_g"], params["x_ln_b"],
                       num_heads=num_heads, alpha=alpha,
                       causal=trg_mask is None,
                       out_dtype=compute_dtype, cdt=compute_dtype)
    # 2) source-target cross-attention + residual + LayerNorm (fused)
    h2 = attn_ln_block(h1, mem, src_m, params["cross_att"],
                       params["dec_ln_g"], params["dec_ln_b"],
                       num_heads=num_heads, alpha=alpha, causal=False,
                       out_dtype=compute_dtype, cdt=compute_dtype)
    # 3) position-wise feed-forward + residual + LayerNorm (fused)
    out = ffn_ln_block(h2, params["ffn"], alpha=alpha,
                       out_dtype=out_dtype, cdt=compute_dtype)
    return out if Tp == Tq else out[:, :Tq]
    # TODO(synk): relative positional encoding (self.E) and return_weights paths
    # are not implemented (module defaults: use_relative_pos_enc=False, None).


# ------------------------- deterministic parameters -------------------------

def init_params(key, size, ff_size):
    ks = iter(jax.random.split(key, 32))

    def lin(out_f, in_f):
        w = jax.random.normal(next(ks), (out_f, in_f), jnp.float32) * 0.05
        b = jax.random.normal(next(ks), (1, out_f), jnp.float32) * 0.02
        return w, b

    def att_params():
        wq, bq = lin(size, size)
        wk, bk = lin(size, size)
        wv, bv = lin(size, size)
        wo, bo = lin(size, size)
        return dict(wq=wq, bq=bq, wk=wk, bk=bk, wv=wv, bv=bv, wo=wo, bo=bo)

    def ln_params():
        g = 1.0 + 0.1 * jax.random.normal(next(ks), (1, size), jnp.float32)
        b = 0.1 * jax.random.normal(next(ks), (1, size), jnp.float32)
        return g, b

    params = {"self_att": att_params(), "cross_att": att_params()}
    params["x_ln_g"], params["x_ln_b"] = ln_params()
    params["dec_ln_g"], params["dec_ln_b"] = ln_params()
    w1, b1 = lin(ff_size, size)
    w2, b2 = lin(size, ff_size)
    g, b = ln_params()
    params["ffn"] = dict(w1=w1, b1=b1, w2=w2, b2=b2, ln_g=g, ln_b=b)
    return params


# ---------------------------- pure-JAX reference -----------------------------

def _mha_ref(q_in, k_in, v_in, mask, p, num_heads):
    D = q_in.shape[-1]
    hd = D // num_heads
    q = q_in @ p["wq"].T + p["bq"][0]
    k = k_in @ p["wk"].T + p["bk"][0]
    v = v_in @ p["wv"].T + p["bv"][0]
    B, Tq, _ = q.shape
    Tk = k.shape[1]
    qh = q.reshape(B, Tq, num_heads, hd).transpose(0, 2, 1, 3)
    kh = k.reshape(B, Tk, num_heads, hd).transpose(0, 2, 1, 3)
    vh = v.reshape(B, Tk, num_heads, hd).transpose(0, 2, 1, 3)
    s = jnp.einsum("bhqd,bhkd->bhqk", qh, kh) / math.sqrt(hd)
    s = jnp.where(mask[:, None, :, :] > 0.5, s, -1e30)
    a = jax.nn.softmax(s, axis=-1)
    ctx = jnp.einsum("bhqk,bhkd->bhqd", a, vh).transpose(0, 2, 1, 3).reshape(B, Tq, D)
    return ctx @ p["wo"].T + p["bo"][0]


def _ln_ref(x, g, b):
    mu = jnp.mean(x, axis=-1, keepdims=True)
    var = jnp.mean(jnp.square(x - mu), axis=-1, keepdims=True)
    return (x - mu) * lax.rsqrt(var + EPS) * g[0] + b[0]


def decoder_layer_ref(x, memory, src_mask, trg_mask, params, num_heads, alpha=1.0):
    trg_m = trg_mask.astype(jnp.float32)
    src_m = src_mask.astype(jnp.float32)
    h1 = _mha_ref(x, x, x, trg_m, params["self_att"], num_heads) + alpha * x
    h1 = _ln_ref(h1, params["x_ln_g"], params["x_ln_b"])
    h2 = _mha_ref(h1, memory, memory, src_m, params["cross_att"], num_heads) + alpha * h1
    h2 = _ln_ref(h2, params["dec_ln_g"], params["dec_ln_b"])
    pf = params["ffn"]
    h = jnp.maximum(h2 @ pf["w1"].T + pf["b1"][0], 0.0)
    y = h @ pf["w2"].T + pf["b2"][0] + alpha * h2
    return _ln_ref(y, pf["ln_g"], pf["ln_b"])


# ------------------------------------ main -----------------------------------

if __name__ == "__main__":
    B, Tq, Tk = 2, 8, 12
    size, ff_size, num_heads = 32, 64, 4
    alpha = 1.0

    key = jax.random.PRNGKey(0)
    k_x, k_mem, k_p = jax.random.split(key, 3)
    x = jax.random.normal(k_x, (B, Tq, size), jnp.float32)
    memory = jax.random.normal(k_mem, (B, Tk, size), jnp.float32)

    # trg_mask: causal [B, Tq, Tq]; src_mask: padding [B, 1, Tk]
    causal = jnp.tril(jnp.ones((Tq, Tq), jnp.bool_))
    trg_mask = jnp.broadcast_to(causal[None, :, :], (B, Tq, Tq))
    src_len = jnp.array([Tk, Tk - 3])
    src_mask = (jnp.arange(Tk)[None, None, :] < src_len[:, None, None])

    params = init_params(k_p, size, ff_size)
    ref = decoder_layer_ref(x, memory, src_mask, trg_mask, params, num_heads, alpha)

    # Path 1: in-kernel causal target mask (trg_mask=None).
    out = transformer_decoder_layer(x, memory, src_mask, None, params,
                                    num_heads, alpha)
    out = jax.block_until_ready(out)
    assert out.shape == (B, Tq, size)
    assert out.dtype == jnp.float32
    err = jnp.max(jnp.abs(out - ref))
    assert jnp.allclose(out, ref, atol=4e-2, rtol=4e-2), f"mismatch (causal), max abs err {err}"

    # Path 2: explicit int8 target mask (module-faithful interface).
    out2 = transformer_decoder_layer(x, memory, src_mask, trg_mask, params,
                                     num_heads, alpha)
    out2 = jax.block_until_ready(out2)
    err2 = jnp.max(jnp.abs(out2 - ref))
    assert jnp.allclose(out2, ref, atol=4e-2, rtol=4e-2), f"mismatch (mask), max abs err {err2}"

    print("KERNEL_OK")
</pallas_src>

<mosaic_0001>
module attributes {stable_mosaic.version = 11 : i64} {
  func.func @kernel(%arg0: i32, %arg1: i32, %arg2: memref<1x8x32xbf16, #tpu.memory_space<vmem>>, %arg3: memref<1x8x32xbf16, #tpu.memory_space<vmem>>, %arg4: memref<32x32xbf16, #tpu.memory_space<vmem>>, %arg5: memref<1x32xf32, #tpu.memory_space<vmem>>, %arg6: memref<32x32xbf16, #tpu.memory_space<vmem>>, %arg7: memref<1x32xf32, #tpu.memory_space<vmem>>, %arg8: memref<32x32xbf16, #tpu.memory_space<vmem>>, %arg9: memref<1x32xf32, #tpu.memory_space<vmem>>, %arg10: memref<32x32xbf16, #tpu.memory_space<vmem>>, %arg11: memref<1x32xf32, #tpu.memory_space<vmem>>, %arg12: memref<1x32xf32, #tpu.memory_space<vmem>>, %arg13: memref<1x32xf32, #tpu.memory_space<vmem>>, %arg14: memref<1x8x32xbf16, #tpu.memory_space<vmem>>, %arg15: memref<8x32xbf16, #tpu.memory_space<vmem>>, %arg16: memref<8x32xbf16, #tpu.memory_space<vmem>>, %arg17: memref<8x32xbf16, #tpu.memory_space<vmem>>) attributes {dimension_semantics = [#tpu.dimension_semantics<parallel>, #tpu.dimension_semantics<arbitrary>], iteration_bounds = array<i64: 2, 1>, scalar_prefetch = 0 : i64, scratch_operands = 3 : i64, tpu.core_type = #tpu.core_type<tc>, window_params = [{transform_indices = @transform_0, window_bounds = array<i64: 1, 8, 32>}, {transform_indices = @transform_1, window_bounds = array<i64: 1, 8, 32>}, {pipeline_mode = #tpu.pipeline_mode<synchronous>, transform_indices = @transform_2, window_bounds = array<i64: 32, 32>}, {pipeline_mode = #tpu.pipeline_mode<synchronous>, transform_indices = @transform_3, window_bounds = array<i64: 1, 32>}, {pipeline_mode = #tpu.pipeline_mode<synchronous>, transform_indices = @transform_4, window_bounds = array<i64: 32, 32>}, {pipeline_mode = #tpu.pipeline_mode<synchronous>, transform_indices = @transform_5, window_bounds = array<i64: 1, 32>}, {pipeline_mode = #tpu.pipeline_mode<synchronous>, transform_indices = @transform_6, window_bounds = array<i64: 32, 32>}, {pipeline_mode = #tpu.pipeline_mode<synchronous>, transform_indices = @transform_7, window_bounds = array<i64: 1, 32>}, {pipeline_mode = #tpu.pipeline_mode<synchronous>, transform_indices = @transform_8, window_bounds = array<i64: 32, 32>}, {pipeline_mode = #tpu.pipeline_mode<synchronous>, transform_indices = @transform_9, window_bounds = array<i64: 1, 32>}, {pipeline_mode = #tpu.pipeline_mode<synchronous>, transform_indices = @transform_10, window_bounds = array<i64: 1, 32>}, {pipeline_mode = #tpu.pipeline_mode<synchronous>, transform_indices = @transform_11, window_bounds = array<i64: 1, 32>}, {transform_indices = @transform_12, window_bounds = array<i64: 1, 8, 32>}]} {
    %c0_i32 = arith.constant 0 : i32
    %0 = arith.cmpi eq, %arg1, %c0_i32 : i32
    %1 = arith.extui %0 : i1 to i32
    %c0_i32_0 = arith.constant 0 : i32
    %2 = arith.cmpi ne, %1, %c0_i32_0 : i32
    scf.if %2 {
      %c0_66 = arith.constant 0 : index
      %c0_67 = arith.constant 0 : index
      %c0_68 = arith.constant 0 : index
      %143 = vector.load %arg3[%c0_66, %c0_67, %c0_68] : memref<1x8x32xbf16, #tpu.memory_space<vmem>>, vector<1x8x32xbf16>
      %144 = vector.shape_cast %143 : vector<1x8x32xbf16> to vector<8x32xbf16>
      %c0_69 = arith.constant 0 : index
      %c0_70 = arith.constant 0 : index
      %145 = vector.load %arg6[%c0_69, %c0_70] : memref<32x32xbf16, #tpu.memory_space<vmem>>, vector<32x32xbf16>
      %cst_71 = arith.constant dense<0.000000e+00> : vector<8x32xf32>
      %146 = tpu.matmul %144, %145, %cst_71 {dimension_numbers = #tpu.dot_dimension_numbers<[1], [0], [0], [1], [0, 0, 1, 1], [], []>} : vector<8x32xbf16>, vector<32x32xbf16>, vector<8x32xf32> -> vector<8x32xf32>
      %c0_72 = arith.constant 0 : index
      %c0_73 = arith.constant 0 : index
      %147 = vector.load %arg7[%c0_72, %c0_73] : memref<1x32xf32, #tpu.memory_space<vmem>>, vector<1x32xf32>
      %148 = vector.shape_cast %147 : vector<1x32xf32> to vector<32xf32>
      %149 = vector.shape_cast %148 : vector<32xf32> to vector<1x32xf32>
      %150 = vector.broadcast %149 : vector<1x32xf32> to vector<8x32xf32>
      %151 = arith.addf %146, %150 : vector<8x32xf32>
      %152 = arith.truncf %151 : vector<8x32xf32> to vector<8x32xbf16>
      %c0_74 = arith.constant 0 : index
      %c0_75 = arith.constant 0 : index
      %153 = vector.load %arg15[%c0_74, %c0_75] : memref<8x32xbf16, #tpu.memory_space<vmem>>, vector<8x32xbf16>
      tpu.vector_store %arg15[%c0_74, %c0_75], %152 {strides = array<i32>} : memref<8x32xbf16, #tpu.memory_space<vmem>>, vector<8x32xbf16>,
      %c0_76 = arith.constant 0 : index
      %c0_77 = arith.constant 0 : index
      %154 = vector.load %arg8[%c0_76, %c0_77] : memref<32x32xbf16, #tpu.memory_space<vmem>>, vector<32x32xbf16>
      %cst_78 = arith.constant dense<0.000000e+00> : vector<8x32xf32>
      %155 = tpu.matmul %144, %154, %cst_78 {dimension_numbers = #tpu.dot_dimension_numbers<[1], [0], [0], [1], [0, 0, 1, 1], [], []>} : vector<8x32xbf16>, vector<32x32xbf16>, vector<8x32xf32> -> vector<8x32xf32>
      %c0_79 = arith.constant 0 : index
      %c0_80 = arith.constant 0 : index
      %156 = vector.load %arg9[%c0_79, %c0_80] : memref<1x32xf32, #tpu.memory_space<vmem>>, vector<1x32xf32>
      %157 = vector.shape_cast %156 : vector<1x32xf32> to vector<32xf32>
      %158 = vector.shape_cast %157 : vector<32xf32> to vector<1x32xf32>
      %159 = vector.broadcast %158 : vector<1x32xf32> to vector<8x32xf32>
      %160 = arith.addf %155, %159 : vector<8x32xf32>
      %161 = arith.truncf %160 : vector<8x32xf32> to vector<8x32xbf16>
      %c0_81 = arith.constant 0 : index
      %c0_82 = arith.constant 0 : index
      %162 = vector.load %arg16[%c0_81, %c0_82] : memref<8x32xbf16, #tpu.memory_space<vmem>>, vector<8x32xbf16>
      tpu.vector_store %arg16[%c0_81, %c0_82], %161 {strides = array<i32>} : memref<8x32xbf16, #tpu.memory_space<vmem>>, vector<8x32xbf16>,
    } else {
    }
    %c0 = arith.constant 0 : index
    %c0_1 = arith.constant 0 : index
    %c0_2 = arith.constant 0 : index
    %3 = vector.load %arg2[%c0, %c0_1, %c0_2] : memref<1x8x32xbf16, #tpu.memory_space<vmem>>, vector<1x8x32xbf16>
    %4 = vector.shape_cast %3 : vector<1x8x32xbf16> to vector<8x32xbf16>
    %5 = arith.extf %4 : vector<8x32xbf16> to vector<8x32xf32>
    %6 = arith.truncf %5 : vector<8x32xf32> to vector<8x32xbf16>
    %c0_3 = arith.constant 0 : index
    %c0_4 = arith.constant 0 : index
    %7 = vector.load %arg4[%c0_3, %c0_4] : memref<32x32xbf16, #tpu.memory_space<vmem>>, vector<32x32xbf16>
    %cst = arith.constant dense<0.000000e+00> : vector<8x32xf32>
    %8 = tpu.matmul %6, %7, %cst {dimension_numbers = #tpu.dot_dimension_numbers<[1], [0], [0], [1], [0, 0, 1, 1], [], []>} : vector<8x32xbf16>, vector<32x32xbf16>, vector<8x32xf32> -> vector<8x32xf32>
    %c0_5 = arith.constant 0 : index
    %c0_6 = arith.constant 0 : index
    %9 = vector.load %arg5[%c0_5, %c0_6] : memref<1x32xf32, #tpu.memory_space<vmem>>, vector<1x32xf32>
    %10 = vector.shape_cast %9 : vector<1x32xf32> to vector<32xf32>
    %11 = vector.shape_cast %10 : vector<32xf32> to vector<1x32xf32>
    %12 = vector.broadcast %11 : vector<1x32xf32> to vector<8x32xf32>
    %13 = arith.addf %8, %12 : vector<8x32xf32>
    %14 = arith.truncf %13 : vector<8x32xf32> to vector<8x32xbf16>
    %c8_i32 = arith.constant 8 : i32
    %15 = arith.muli %arg1, %c8_i32 : i32
    %16 = tpu.iota {dimensions = array<i32: 0>} : vector<8x8xi32>
    %17 = vector.broadcast %15 : i32 to vector<8x8xi32>
    %18 = arith.addi %17, %16 : vector<8x8xi32>
    %19 = tpu.iota {dimensions = array<i32: 1>} : vector<8x8xi32>
    %20 = arith.cmpi sle, %19, %18 : vector<8x8xi32>
    %cst_7 = arith.constant 0.000000e+00 : f32
    %cst_8 = arith.constant -1.000000e+30 : f32
    %21 = vector.broadcast %cst_7 : f32 to vector<8x8xf32>
    %22 = vector.broadcast %cst_8 : f32 to vector<8x8xf32>
    %23 = arith.select %20, %21, %22 : vector<8x8xi1>, vector<8x8xf32>
    %24 = vector.extract_strided_slice %14 {offsets = [0, 0], sizes = [8, 8], strides = [1, 1]} : vector<8x32xbf16> to vector<8x8xbf16>
    %c0_9 = arith.constant 0 : index
    %c0_10 = arith.constant 0 : index
    %25 = vector.load %arg15[%c0_9, %c0_10] : memref<8x32xbf16, #tpu.memory_space<vmem>>, vector<8x8xbf16>
    %cst_11 = arith.constant dense<0.000000e+00> : vector<8x8xf32>
    %26 = tpu.matmul %24, %25, %cst_11 {dimension_numbers = #tpu.dot_dimension_numbers<[1], [1], [0], [0], [0, 0, 1, 0], [], []>} : vector<8x8xbf16>, vector<8x8xbf16>, vector<8x8xf32> -> vector<8x8xf32>
    %27 = arith.addf %26, %23 : vector<8x8xf32>
    %cst_12 = arith.constant dense<0xFF800000> : vector<8xf32>
    %28 = vector.multi_reduction <maximumf>, %27, %cst_12 [1] : vector<8x8xf32> to vector<8xf32>
    %29 = vector.shape_cast %28 : vector<8xf32> to vector<8x1xf32>
    %30 = vector.broadcast %29 : vector<8x1xf32> to vector<8x8xf32>
    %31 = arith.subf %27, %30 : vector<8x8xf32>
    %32 = math.exp %31 : vector<8x8xf32>
    %cst_13 = arith.constant dense<0.000000e+00> : vector<8xf32>
    %33 = vector.multi_reduction <add>, %32, %cst_13 [1] : vector<8x8xf32> to vector<8xf32>
    %34 = vector.shape_cast %33 : vector<8xf32> to vector<8x1xf32>
    %35 = tpu.reciprocal %34 {approx = true} : vector<8x1xf32> -> vector<8x1xf32>
    %36 = vector.broadcast %35 : vector<8x1xf32> to vector<8x8xf32>
    %37 = arith.mulf %32, %36 : vector<8x8xf32>
    %38 = arith.truncf %37 : vector<8x8xf32> to vector<8x8xbf16>
    %c0_14 = arith.constant 0 : index
    %c0_15 = arith.constant 0 : index
    %39 = vector.load %arg16[%c0_14, %c0_15] : memref<8x32xbf16, #tpu.memory_space<vmem>>, vector<8x8xbf16>
    %cst_16 = arith.constant dense<0.000000e+00> : vector<8x8xf32>
    %40 = tpu.matmul %38, %39, %cst_16 {dimension_numbers = #tpu.dot_dimension_numbers<[1], [0], [0], [1], [0, 0, 1, 1], [], []>} : vector<8x8xbf16>, vector<8x8xbf16>, vector<8x8xf32> -> vector<8x8xf32>
    %41 = arith.truncf %40 : vector<8x8xf32> to vector<8x8xbf16>
    %c0_17 = arith.constant 0 : index
    %c0_18 = arith.constant 0 : index
    %42 = vector.load %arg17[%c0_17, %c0_18] : memref<8x32xbf16, #tpu.memory_space<vmem>>, vector<8x8xbf16>
    tpu.vector_store %arg17[%c0_17, %c0_18], %41 {strides = array<i32>} : memref<8x32xbf16, #tpu.memory_space<vmem>>, vector<8x8xbf16>,
    %43 = vector.extract_strided_slice %14 {offsets = [0, 8], sizes = [8, 8], strides = [1, 1]} : vector<8x32xbf16> to vector<8x8xbf16>
    %c0_19 = arith.constant 0 : index
    %c8 = arith.constant 8 : index
    %44 = vector.load %arg15[%c0_19, %c8] : memref<8x32xbf16, #tpu.memory_space<vmem>>, vector<8x8xbf16>
    %cst_20 = arith.constant dense<0.000000e+00> : vector<8x8xf32>
    %45 = tpu.matmul %43, %44, %cst_20 {dimension_numbers = #tpu.dot_dimension_numbers<[1], [1], [0], [0], [0, 0, 1, 0], [], []>} : vector<8x8xbf16>, vector<8x8xbf16>, vector<8x8xf32> -> vector<8x8xf32>
    %46 = arith.addf %45, %23 : vector<8x8xf32>
    %cst_21 = arith.constant dense<0xFF800000> : vector<8xf32>
    %47 = vector.multi_reduction <maximumf>, %46, %cst_21 [1] : vector<8x8xf32> to vector<8xf32>
    %48 = vector.shape_cast %47 : vector<8xf32> to vector<8x1xf32>
    %49 = vector.broadcast %48 : vector<8x1xf32> to vector<8x8xf32>
    %50 = arith.subf %46, %49 : vector<8x8xf32>
    %51 = math.exp %50 : vector<8x8xf32>
    %cst_22 = arith.constant dense<0.000000e+00> : vector<8xf32>
    %52 = vector.multi_reduction <add>, %51, %cst_22 [1] : vector<8x8xf32> to vector<8xf32>
    %53 = vector.shape_cast %52 : vector<8xf32> to vector<8x1xf32>
    %54 = tpu.reciprocal %53 {approx = true} : vector<8x1xf32> -> vector<8x1xf32>
    %55 = vector.broadcast %54 : vector<8x1xf32> to vector<8x8xf32>
    %56 = arith.mulf %51, %55 : vector<8x8xf32>
    %57 = arith.truncf %56 : vector<8x8xf32> to vector<8x8xbf16>
    %c0_23 = arith.constant 0 : index
    %c8_24 = arith.constant 8 : index
    %58 = vector.load %arg16[%c0_23, %c8_24] : memref<8x32xbf16, #tpu.memory_space<vmem>>, vector<8x8xbf16>
    %cst_25 = arith.constant dense<0.000000e+00> : vector<8x8xf32>
    %59 = tpu.matmul %57, %58, %cst_25 {dimension_numbers = #tpu.dot_dimension_numbers<[1], [0], [0], [1], [0, 0, 1, 1], [], []>} : vector<8x8xbf16>, vector<8x8xbf16>, vector<8x8xf32> -> vector<8x8xf32>
    %60 = arith.truncf %59 : vector<8x8xf32> to vector<8x8xbf16>
    %c0_26 = arith.constant 0 : index
    %c8_27 = arith.constant 8 : index
    %61 = vector.load %arg17[%c0_26, %c8_27] : memref<8x32xbf16, #tpu.memory_space<vmem>>, vector<8x8xbf16>
    tpu.vector_store %arg17[%c0_26, %c8_27], %60 {strides = array<i32>} : memref<8x32xbf16, #tpu.memory_space<vmem>>, vector<8x8xbf16>,
    %62 = vector.extract_strided_slice %14 {offsets = [0, 16], sizes = [8, 8], strides = [1, 1]} : vector<8x32xbf16> to vector<8x8xbf16>
    %c0_28 = arith.constant 0 : index
    %c16 = arith.constant 16 : index
    %63 = vector.load %arg15[%c0_28, %c16] : memref<8x32xbf16, #tpu.memory_space<vmem>>, vector<8x8xbf16>
    %cst_29 = arith.constant dense<0.000000e+00> : vector<8x8xf32>
    %64 = tpu.matmul %62, %63, %cst_29 {dimension_numbers = #tpu.dot_dimension_numbers<[1], [1], [0], [0], [0, 0, 1, 0], [], []>} : vector<8x8xbf16>, vector<8x8xbf16>, vector<8x8xf32> -> vector<8x8xf32>
    %65 = arith.addf %64, %23 : vector<8x8xf32>
    %cst_30 = arith.constant dense<0xFF800000> : vector<8xf32>
    %66 = vector.multi_reduction <maximumf>, %65, %cst_30 [1] : vector<8x8xf32> to vector<8xf32>
    %67 = vector.shape_cast %66 : vector<8xf32> to vector<8x1xf32>
    %68 = vector.broadcast %67 : vector<8x1xf32> to vector<8x8xf32>
    %69 = arith.subf %65, %68 : vector<8x8xf32>
    %70 = math.exp %69 : vector<8x8xf32>
    %cst_31 = arith.constant dense<0.000000e+00> : vector<8xf32>
    %71 = vector.multi_reduction <add>, %70, %cst_31 [1] : vector<8x8xf32> to vector<8xf32>
    %72 = vector.shape_cast %71 : vector<8xf32> to vector<8x1xf32>
    %73 = tpu.reciprocal %72 {approx = true} : vector<8x1xf32> -> vector<8x1xf32>
    %74 = vector.broadcast %73 : vector<8x1xf32> to vector<8x8xf32>
    %75 = arith.mulf %70, %74 : vector<8x8xf32>
    %76 = arith.truncf %75 : vector<8x8xf32> to vector<8x8xbf16>
    %c0_32 = arith.constant 0 : index
    %c16_33 = arith.constant 16 : index
    %77 = vector.load %arg16[%c0_32, %c16_33] : memref<8x32xbf16, #tpu.memory_space<vmem>>, vector<8x8xbf16>
    %cst_34 = arith.constant dense<0.000000e+00> : vector<8x8xf32>
    %78 = tpu.matmul %76, %77, %cst_34 {dimension_numbers = #tpu.dot_dimension_numbers<[1], [0], [0], [1], [0, 0, 1, 1], [], []>} : vector<8x8xbf16>, vector<8x8xbf16>, vector<8x8xf32> -> vector<8x8xf32>
    %79 = arith.truncf %78 : vector<8x8xf32> to vector<8x8xbf16>
    %c0_35 = arith.constant 0 : index
    %c16_36 = arith.constant 16 : index
    %80 = vector.load %arg17[%c0_35, %c16_36] : memref<8x32xbf16, #tpu.memory_space<vmem>>, vector<8x8xbf16>
    tpu.vector_store %arg17[%c0_35, %c16_36], %79 {strides = array<i32>} : memref<8x32xbf16, #tpu.memory_space<vmem>>, vector<8x8xbf16>,
    %81 = vector.extract_strided_slice %14 {offsets = [0, 24], sizes = [8, 8], strides = [1, 1]} : vector<8x32xbf16> to vector<8x8xbf16>
    %c0_37 = arith.constant 0 : index
    %c24 = arith.constant 24 : index
    %82 = vector.load %arg15[%c0_37, %c24] : memref<8x32xbf16, #tpu.memory_space<vmem>>, vector<8x8xbf16>
    %cst_38 = arith.constant dense<0.000000e+00> : vector<8x8xf32>
    %83 = tpu.matmul %81, %82, %cst_38 {dimension_numbers = #tpu.dot_dimension_numbers<[1], [1], [0], [0], [0, 0, 1, 0], [], []>} : vector<8x8xbf16>, vector<8x8xbf16>, vector<8x8xf32> -> vector<8x8xf32>
    %84 = arith.addf %83, %23 : vector<8x8xf32>
    %cst_39 = arith.constant dense<0xFF800000> : vector<8xf32>
    %85 = vector.multi_reduction <maximumf>, %84, %cst_39 [1] : vector<8x8xf32> to vector<8xf32>
    %86 = vector.shape_cast %85 : vector<8xf32> to vector<8x1xf32>
    %87 = vector.broadcast %86 : vector<8x1xf32> to vector<8x8xf32>
    %88 = arith.subf %84, %87 : vector<8x8xf32>
    %89 = math.exp %88 : vector<8x8xf32>
    %cst_40 = arith.constant dense<0.000000e+00> : vector<8xf32>
    %90 = vector.multi_reduction <add>, %89, %cst_40 [1] : vector<8x8xf32> to vector<8xf32>
    %91 = vector.shape_cast %90 : vector<8xf32> to vector<8x1xf32>
    %92 = tpu.reciprocal %91 {approx = true} : vector<8x1xf32> -> vector<8x1xf32>
    %93 = vector.broadcast %92 : vector<8x1xf32> to vector<8x8xf32>
    %94 = arith.mulf %89, %93 : vector<8x8xf32>
    %95 = arith.truncf %94 : vector<8x8xf32> to vector<8x8xbf16>
    %c0_41 = arith.constant 0 : index
    %c24_42 = arith.constant 24 : index
    %96 = vector.load %arg16[%c0_41, %c24_42] : memref<8x32xbf16, #tpu.memory_space<vmem>>, vector<8x8xbf16>
    %cst_43 = arith.constant dense<0.000000e+00> : vector<8x8xf32>
    %97 = tpu.matmul %95, %96, %cst_43 {dimension_numbers = #tpu.dot_dimension_numbers<[1], [0], [0], [1], [0, 0, 1, 1], [], []>} : vector<8x8xbf16>, vector<8x8xbf16>, vector<8x8xf32> -> vector<8x8xf32>
    %98 = arith.truncf %97 : vector<8x8xf32> to vector<8x8xbf16>
    %c0_44 = arith.constant 0 : index
    %c24_45 = arith.constant 24 : index
    %99 = vector.load %arg17[%c0_44, %c24_45] : memref<8x32xbf16, #tpu.memory_space<vmem>>, vector<8x8xbf16>
    tpu.vector_store %arg17[%c0_44, %c24_45], %98 {strides = array<i32>} : memref<8x32xbf16, #tpu.memory_space<vmem>>, vector<8x8xbf16>,
    %c0_46 = arith.constant 0 : index
    %c0_47 = arith.constant 0 : index
    %100 = vector.load %arg17[%c0_46, %c0_47] : memref<8x32xbf16, #tpu.memory_space<vmem>>, vector<8x32xbf16>
    %c0_48 = arith.constant 0 : index
    %c0_49 = arith.constant 0 : index
    %101 = vector.load %arg10[%c0_48, %c0_49] : memref<32x32xbf16, #tpu.memory_space<vmem>>, vector<32x32xbf16>
    %cst_50 = arith.constant dense<0.000000e+00> : vector<8x32xf32>
    %102 = tpu.matmul %100, %101, %cst_50 {dimension_numbers = #tpu.dot_dimension_numbers<[1], [0], [0], [1], [0, 0, 1, 1], [], []>} : vector<8x32xbf16>, vector<32x32xbf16>, vector<8x32xf32> -> vector<8x32xf32>
    %c0_51 = arith.constant 0 : index
    %c0_52 = arith.constant 0 : index
    %103 = vector.load %arg11[%c0_51, %c0_52] : memref<1x32xf32, #tpu.memory_space<vmem>>, vector<1x32xf32>
    %104 = vector.shape_cast %103 : vector<1x32xf32> to vector<32xf32>
    %105 = vector.shape_cast %104 : vector<32xf32> to vector<1x32xf32>
    %106 = vector.broadcast %105 : vector<1x32xf32> to vector<8x32xf32>
    %107 = arith.addf %102, %106 : vector<8x32xf32>
    %cst_53 = arith.constant 1.000000e+00 : f32
    %108 = vector.broadcast %cst_53 : f32 to vector<8x32xf32>
    %109 = arith.mulf %108, %5 : vector<8x32xf32>
    %110 = arith.addf %107, %109 : vector<8x32xf32>
    %c0_54 = arith.constant 0 : index
    %c0_55 = arith.constant 0 : index
    %111 = vector.load %arg12[%c0_54, %c0_55] : memref<1x32xf32, #tpu.memory_space<vmem>>, vector<1x32xf32>
    %112 = vector.shape_cast %111 : vector<1x32xf32> to vector<32xf32>
    %c0_56 = arith.constant 0 : index
    %c0_57 = arith.constant 0 : index
    %113 = vector.load %arg13[%c0_56, %c0_57] : memref<1x32xf32, #tpu.memory_space<vmem>>, vector<1x32xf32>
    %114 = vector.shape_cast %113 : vector<1x32xf32> to vector<32xf32>
    %cst_58 = arith.constant dense<0.000000e+00> : vector<8xf32>
    %115 = vector.multi_reduction <add>, %110, %cst_58 [1] : vector<8x32xf32> to vector<8xf32>
    %116 = vector.shape_cast %115 : vector<8xf32> to vector<8x1xf32>
    %cst_59 = arith.constant 3.200000e+01 : f32
    %117 = vector.broadcast %cst_59 : f32 to vector<8x1xf32>
    %118 = arith.divf %116, %117 : vector<8x1xf32>
    %119 = vector.broadcast %118 : vector<8x1xf32> to vector<8x32xf32>
    %120 = arith.subf %110, %119 : vector<8x32xf32>
    %121 = arith.mulf %120, %120 : vector<8x32xf32>
    %cst_60 = arith.constant dense<0.000000e+00> : vector<8xf32>
    %122 = vector.multi_reduction <add>, %121, %cst_60 [1] : vector<8x32xf32> to vector<8xf32>
    %123 = vector.shape_cast %122 : vector<8xf32> to vector<8x1xf32>
    %cst_61 = arith.constant 3.200000e+01 : f32
    %124 = vector.broadcast %cst_61 : f32 to vector<8x1xf32>
    %125 = arith.divf %123, %124 : vector<8x1xf32>
    %126 = vector.broadcast %118 : vector<8x1xf32> to vector<8x32xf32>
    %127 = arith.subf %110, %126 : vector<8x32xf32>
    %cst_62 = arith.constant 9.99999997E-7 : f32
    %128 = vector.broadcast %cst_62 : f32 to vector<8x1xf32>
    %129 = arith.addf %125, %128 : vector<8x1xf32>
    %130 = math.rsqrt %129 : vector<8x1xf32>
    %131 = vector.broadcast %130 : vector<8x1xf32> to vector<8x32xf32>
    %132 = arith.mulf %127, %131 : vector<8x32xf32>
    %133 = vector.shape_cast %112 : vector<32xf32> to vector<1x32xf32>
    %134 = vector.broadcast %133 : vector<1x32xf32> to vector<8x32xf32>
    %135 = arith.mulf %132, %134 : vector<8x32xf32>
    %136 = vector.shape_cast %114 : vector<32xf32> to vector<1x32xf32>
    %137 = vector.broadcast %136 : vector<1x32xf32> to vector<8x32xf32>
    %138 = arith.addf %135, %137 : vector<8x32xf32>
    %139 = arith.truncf %138 : vector<8x32xf32> to vector<8x32xbf16>
    %c0_63 = arith.constant 0 : index
    %c0_64 = arith.constant 0 : index
    %c0_65 = arith.constant 0 : index
    %140 = vector.load %arg14[%c0_63, %c0_64, %c0_65] : memref<1x8x32xbf16, #tpu.memory_space<vmem>>, vector<1x8x32xbf16>
    %141 = vector.shape_cast %140 : vector<1x8x32xbf16> to vector<8x32xbf16>
    %142 = vector.shape_cast %139 : vector<8x32xbf16> to vector<1x8x32xbf16>
    tpu.vector_store %arg14[%c0_63, %c0_64, %c0_65], %142 {strides = array<i32>} : memref<1x8x32xbf16, #tpu.memory_space<vmem>>, vector<1x8x32xbf16>,
    return
  }
  func.func @transform_0(%arg0: i32, %arg1: i32) -> (i32, i32, i32) {
    %c0_i32 = arith.constant 0 : i32
    %c0_i32_0 = arith.constant 0 : i32
    return %arg0, %arg1, %c0_i32 : i32, i32, i32
  }
  func.func @transform_1(%arg0: i32, %arg1: i32) -> (i32, i32, i32) {
    %c0_i32 = arith.constant 0 : i32
    %c0_i32_0 = arith.constant 0 : i32
    %c0_i32_1 = arith.constant 0 : i32
    return %arg0, %c0_i32, %c0_i32_0 : i32, i32, i32
  }
  func.func @transform_2(%arg0: i32, %arg1: i32) -> (i32, i32) {
    %c0_i32 = arith.constant 0 : i32
    %c0_i32_0 = arith.constant 0 : i32
    %c0_i32_1 = arith.constant 0 : i32
    return %c0_i32, %c0_i32_0 : i32, i32
  }
  func.func @transform_3(%arg0: i32, %arg1: i32) -> (i32, i32) {
    %c0_i32 = arith.constant 0 : i32
    %c0_i32_0 = arith.constant 0 : i32
    %c0_i32_1 = arith.constant 0 : i32
    return %c0_i32, %c0_i32_0 : i32, i32
  }
  func.func @transform_4(%arg0: i32, %arg1: i32) -> (i32, i32) {
    %c0_i32 = arith.constant 0 : i32
    %c0_i32_0 = arith.constant 0 : i32
    %c0_i32_1 = arith.constant 0 : i32
    return %c0_i32, %c0_i32_0 : i32, i32
  }
  func.func @transform_5(%arg0: i32, %arg1: i32) -> (i32, i32) {
    %c0_i32 = arith.constant 0 : i32
    %c0_i32_0 = arith.constant 0 : i32
    %c0_i32_1 = arith.constant 0 : i32
    return %c0_i32, %c0_i32_0 : i32, i32
  }
  func.func @transform_6(%arg0: i32, %arg1: i32) -> (i32, i32) {
    %c0_i32 = arith.constant 0 : i32
    %c0_i32_0 = arith.constant 0 : i32
    %c0_i32_1 = arith.constant 0 : i32
    return %c0_i32, %c0_i32_0 : i32, i32
  }
  func.func @transform_7(%arg0: i32, %arg1: i32) -> (i32, i32) {
    %c0_i32 = arith.constant 0 : i32
    %c0_i32_0 = arith.constant 0 : i32
    %c0_i32_1 = arith.constant 0 : i32
    return %c0_i32, %c0_i32_0 : i32, i32
  }
  func.func @transform_8(%arg0: i32, %arg1: i32) -> (i32, i32) {
    %c0_i32 = arith.constant 0 : i32
    %c0_i32_0 = arith.constant 0 : i32
    %c0_i32_1 = arith.constant 0 : i32
    return %c0_i32, %c0_i32_0 : i32, i32
  }
  func.func @transform_9(%arg0: i32, %arg1: i32) -> (i32, i32) {
    %c0_i32 = arith.constant 0 : i32
    %c0_i32_0 = arith.constant 0 : i32
    %c0_i32_1 = arith.constant 0 : i32
    return %c0_i32, %c0_i32_0 : i32, i32
  }
  func.func @transform_10(%arg0: i32, %arg1: i32) -> (i32, i32) {
    %c0_i32 = arith.constant 0 : i32
    %c0_i32_0 = arith.constant 0 : i32
    %c0_i32_1 = arith.constant 0 : i32
    return %c0_i32, %c0_i32_0 : i32, i32
  }
  func.func @transform_11(%arg0: i32, %arg1: i32) -> (i32, i32) {
    %c0_i32 = arith.constant 0 : i32
    %c0_i32_0 = arith.constant 0 : i32
    %c0_i32_1 = arith.constant 0 : i32
    return %c0_i32, %c0_i32_0 : i32, i32
  }
  func.func @transform_12(%arg0: i32, %arg1: i32) -> (i32, i32, i32) {
    %c0_i32 = arith.constant 0 : i32
    %c0_i32_0 = arith.constant 0 : i32
    return %arg0, %arg1, %c0_i32 : i32, i32, i32
  }
}

</mosaic_0001>

<llo_original>
// kernel: tpu_custom_call.1
$region0: #{tpu_custom_call.1}
  #allocation0 [shape = 'u32[]', space=smem, size = 0x4, offset = 0x4, fixed_abs, tag = 'smem constant byte address 0x4 - core index']
  #allocation1 [shape = 'u32[144,128]{1,0:T(1,128)}', space=vmem, size = 0x12000, scoped, tag = 'internal scratch']
  #allocation2 [shape = 'bf16[8,32]{1,0:T(8,128)(2,1)}', space=vmem, size = 0x800, scoped, tag = 'scratch operand']
  #allocation3 [shape = 'bf16[8,32]{1,0:T(8,128)(2,1)}', space=vmem, size = 0x800, scoped, tag = 'scratch operand']
  #allocation4 [shape = 'bf16[8,32]{1,0:T(8,128)(2,1)}', space=vmem, size = 0x800, scoped, tag = 'scratch operand']
  %s0 = inlined_call_operand.hbm [shape: bf16[2,8,32], index: 0, kind: input, shape index: {}]
  %s1 = inlined_call_operand.hbm [shape: bf16[2,8,32], index: 1, kind: input, shape index: {}]
  %s2 = inlined_call_operand.hbm [shape: bf16[32,32], index: 2, kind: input, shape index: {}]
  %s3 = inlined_call_operand.vmem [shape: f32[1,32], index: 3, kind: input, shape index: {}]
  %s4 = inlined_call_operand.hbm [shape: bf16[32,32], index: 4, kind: input, shape index: {}]
  %s5 = inlined_call_operand.vmem [shape: f32[1,32], index: 5, kind: input, shape index: {}]
  %s6 = inlined_call_operand.hbm [shape: bf16[32,32], index: 6, kind: input, shape index: {}]
  %s7 = inlined_call_operand.vmem [shape: f32[1,32], index: 7, kind: input, shape index: {}]
  %s8 = inlined_call_operand.hbm [shape: bf16[32,32], index: 8, kind: input, shape index: {}]
  %s9 = inlined_call_operand.vmem [shape: f32[1,32], index: 9, kind: input, shape index: {}]
  %s10 = inlined_call_operand.vmem [shape: f32[1,32], index: 10, kind: input, shape index: {}]
  %s11 = inlined_call_operand.vmem [shape: f32[1,32], index: 11, kind: input, shape index: {}]
  %s12 = inlined_call_operand.hbm [shape: bf16[2,8,32], index: 12, kind: output, shape index: {}]
  %s13 = sld [smem:[#allocation0]]
  $region109: #{tpu_custom_call.1} parent=0
    _
  %s15 = ssub.s32 1, %s13
  %s16 = scalar_select 0, %s15, %s13
  $region1: #{tpu_custom_call.1} parent=0
    #allocation5 [shape = 'u8[4096]{0}', space=vmem, size = 0x1000, scoped, tag = 'input window, operand 0']
    #allocation6 [shape = 's32[2]{0}', space=sflag, size = 0x8, scoped, tag = 'scoped memory for tpu_custom_call.1']
    #allocation7 [shape = 's32[2]{0}', space=sflag, size = 0x8, scoped, tag = 'scoped memory for tpu_custom_call.1']
    #allocation8 [shape = 'u8[4096]{0}', space=vmem, size = 0x1000, scoped, tag = 'input window, operand 1']
    #allocation9 [shape = 's32[2]{0}', space=sflag, size = 0x8, scoped, tag = 'scoped memory for tpu_custom_call.1']
    #allocation10 [shape = 'u8[8192]{0}', space=vmem, size = 0x2000, scoped, tag = 'input window, operand 2, single buffered']
    #allocation11 [shape = 'u8[8192]{0}', space=vmem, size = 0x2000, scoped, tag = 'input window, operand 4, single buffered']
    #allocation12 [shape = 's32[1]{0}', space=sflag, size = 0x4, scoped, tag = 'scoped memory for tpu_custom_call.1']
    #allocation13 [shape = 'u8[8192]{0}', space=vmem, size = 0x2000, scoped, tag = 'input window, operand 6, single buffered']
    #allocation14 [shape = 'u8[8192]{0}', space=vmem, size = 0x2000, scoped, tag = 'input window, operand 8, single buffered']
    #allocation15 [shape = 's32[1]{0}', space=sflag, size = 0x4, scoped, tag = 'scoped memory for tpu_custom_call.1']
    #allocation16 [shape = 'u8[4096]{0}', space=vmem, size = 0x1000, scoped, tag = 'output window, operand 0']
    %17 = vsyncpa [#allocation6], 0
    %s18 = scalar_lea.sflag [#allocation6], 1
    %19 = vsyncpa %s18, 0
    %20 = vsyncpa [#allocation9], 0
    %s21 = scalar_lea.sflag [#allocation9], 1
    %22 = vsyncpa %s21, 0
    %23 = vsyncpa [#allocation12], 0
    %24 = vsyncpa [#allocation15], 0
    %25 = vsyncpa [#allocation7], 0
    %s26 = scalar_lea.sflag [#allocation7], 1
    %27 = vsyncpa %s26, 0
    loop: start=0, step=1, limit=4
    $region2: #{tpu_custom_call.1} parent=1 // loop_pre_header
      _
    $region3: #{tpu_custom_call.1} parent=1 // loop_header
      %s29 = sphi 0, %s33
      %p30 = scmp.ge.s32.totalorder %s29, 4
      %s36 = sphi 0, %s48
      %s37 = sphi 0, %s44
      %s38 = sphi 0, %s36
      %s39 = sphi 0, %s37
      %s40 = sphi 0, %s38
      %s41 = sphi 0, %s39
      %s53 = sphi 0, %s55
      %s56 = sphi 0, %s53
      %s57 = sphi 0, %s56
      %s73 = sphi 0, %s57
      %s79 = sphi 0, %s81
      %s82 = sphi 0, %s79
      %s83 = sphi 0, %s82
      %s99 = sphi 0, %s83
      %s103 = sphi 0, %s103
      %s105 = sphi 0, %s103
      %s106 = sphi 0, %s105
      %s120 = sphi 0, %s106
      %s124 = sphi 0, %s124
      %s126 = sphi 0, %s124
      %s127 = sphi 0, %s126
      %s141 = sphi 0, %s127
      %s145 = sphi 0, %s145
      %s147 = sphi 0, %s145
      %s148 = sphi 0, %s147
      %s162 = sphi 0, %s148
      %s166 = sphi 0, %s166
      %s168 = sphi 0, %s166
      %s169 = sphi 0, %s168
      %s183 = sphi 0, %s169
      %s187 = sphi 0, %s187
      %s189 = sphi 0, %s187
      %s190 = sphi 0, %s189
      %s204 = sphi 0, %s190
      %s208 = sphi 0, %s208
      %s210 = sphi 0, %s208
      %s211 = sphi 0, %s210
      %s225 = sphi 0, %s211
      %s229 = sphi 0, %s229
      %s231 = sphi 0, %s229
      %s232 = sphi 0, %s231
      %s246 = sphi 0, %s232
      %s250 = sphi 0, %s250
      %s252 = sphi 0, %s250
      %s253 = sphi 0, %s252
      %s267 = sphi 0, %s253
      %s271 = sphi 0, %s271
      %s273 = sphi 0, %s271
      %s274 = sphi 0, %s273
      %s288 = sphi 0, %s274
      %s292 = sphi 0, %s292
      %s294 = sphi 0, %s292
      %s295 = sphi 0, %s294
      %s309 = sphi 0, %s295
      %s317 = sphi 0, %s319
      %s320 = sphi 0, %s317
      %s321 = sphi 0, %s320
      %s337 = sphi 0, %s321
    $region4: #{tpu_custom_call.1} parent=1 // loop_header_branch
      %32 = sbr.rel (%p30) target = $region8
    $region5: #{tpu_custom_call.1} parent=1 // loop_body
      %s34 = ssub.s32 %s29, 1
      %s35 = ssub.s32 %s29, 2
      %s42 = sadd.s32 1, %s37
      %p43 = scmp.ge.s32.totalorder %s42, 1
      %s44 = scalar_select %p43, 0, %s42
      %s45 = sadd.s32 1, %s36
      %s46 = scalar_select %p43, %s45, %s36
      %p47 = scmp.ge.s32.totalorder %s46, 2
      %s48 = scalar_select %p47, 0, %s46
      %s49 = ssub.s32 %s36, %s48
      %s50 = ssub.s32 %s37, %s44
      %s51 = sor.u32 %s49, %s50
      %p52 = scmp.eq.s32.totalorder %s51, 0
      %s54 = sadd.s32 %s53, 1
      %s55 = scalar_select %p52, %s53, %s54
      %p58 = pneg %p52
      %p59 = scmp.eq.s32.totalorder %s29, 1
      %p60 = por %p58, %p59
      %p61 = scmp.ne.s32.totalorder %s53, %s56
      %p62 = scmp.eq.s32.totalorder %s29, 0
      %p63 = por %p61, %p62
      %p64 = scmp.ne.s32.totalorder %s53, %s56
      %p65 = scmp.eq.s32.totalorder %s34, 1
      %p66 = por %p64, %p65
      %p67 = scmp.ne.s32.totalorder %s56, %s57
      %p68 = scmp.eq.s32.totalorder %s34, 0
      %p69 = por %p67, %p68
      %p70 = scmp.ne.s32.totalorder %s56, %s57
      %p71 = scmp.eq.s32.totalorder %s35, 1
      %p72 = por %p70, %p71
      %p74 = scmp.ne.s32.totalorder %s57, %s73
      %p75 = scmp.eq.s32.totalorder %s35, 0
      %p76 = por %p74, %p75
      %s77 = ssub.s32 %s36, %s48
      %p78 = scmp.eq.s32.totalorder %s77, 0
      %s80 = sadd.s32 %s79, 1
      %s81 = scalar_select %p78, %s79, %s80
      %p84 = pneg %p78
      %p85 = scmp.eq.s32.totalorder %s29, 1
      %p86 = por %p84, %p85
      %p87 = scmp.ne.s32.totalorder %s79, %s82
      %p88 = scmp.eq.s32.totalorder %s29, 0
      %p89 = por %p87, %p88
      %p90 = scmp.ne.s32.totalorder %s79, %s82
      %p91 = scmp.eq.s32.totalorder %s34, 1
      %p92 = por %p90, %p91
      %p93 = scmp.ne.s32.totalorder %s82, %s83
      %p94 = scmp.eq.s32.totalorder %s34, 0
      %p95 = por %p93, %p94
      %p96 = scmp.ne.s32.totalorder %s82, %s83
      %p97 = scmp.eq.s32.totalorder %s35, 1
      %p98 = por %p96, %p97
      %p100 = scmp.ne.s32.totalorder %s83, %s99
      %p101 = scmp.eq.s32.totalorder %s35, 0
      %p102 = por %p100, %p101
      %s104 = sadd.s32 %s103, 1
      %p107 = scmp.eq.s32.totalorder %s29, 1
      %p108 = scmp.ne.s32.totalorder %s103, %s105
      %p109 = scmp.eq.s32.totalorder %s29, 0
      %p110 = por %p108, %p109
      %p111 = scmp.ne.s32.totalorder %s103, %s105
      %p112 = scmp.eq.s32.totalorder %s34, 1
      %p113 = por %p111, %p112
      %p114 = scmp.ne.s32.totalorder %s105, %s106
      %p115 = scmp.eq.s32.totalorder %s34, 0
      %p116 = por %p114, %p115
      %p117 = scmp.ne.s32.totalorder %s105, %s106
      %p118 = scmp.eq.s32.totalorder %s35, 1
      %p119 = por %p117, %p118
      %p121 = scmp.ne.s32.totalorder %s106, %s120
      %p122 = scmp.eq.s32.totalorder %s35, 0
      %p123 = por %p121, %p122
      %s125 = sadd.s32 %s124, 1
      %p128 = scmp.eq.s32.totalorder %s29, 1
      %p129 = scmp.ne.s32.totalorder %s124, %s126
      %p130 = scmp.eq.s32.totalorder %s29, 0
      %p131 = por %p129, %p130
      %p132 = scmp.ne.s32.totalorder %s124, %s126
      %p133 = scmp.eq.s32.totalorder %s34, 1
      %p134 = por %p132, %p133
      %p135 = scmp.ne.s32.totalorder %s126, %s127
      %p136 = scmp.eq.s32.totalorder %s34, 0
      %p137 = por %p135, %p136
      %p138 = scmp.ne.s32.totalorder %s126, %s127
      %p139 = scmp.eq.s32.totalorder %s35, 1
      %p140 = por %p138, %p139
      %p142 = scmp.ne.s32.totalorder %s127, %s141
      %p143 = scmp.eq.s32.totalorder %s35, 0
      %p144 = por %p142, %p143
      %s146 = sadd.s32 %s145, 1
      %p149 = scmp.eq.s32.totalorder %s29, 1
      %p150 = scmp.ne.s32.totalorder %s145, %s147
      %p151 = scmp.eq.s32.totalorder %s29, 0
      %p152 = por %p150, %p151
      %p153 = scmp.ne.s32.totalorder %s145, %s147
      %p154 = scmp.eq.s32.totalorder %s34, 1
      %p155 = por %p153, %p154
      %p156 = scmp.ne.s32.totalorder %s147, %s148
      %p157 = scmp.eq.s32.totalorder %s34, 0
      %p158 = por %p156, %p157
      %p159 = scmp.ne.s32.totalorder %s147, %s148
      %p160 = scmp.eq.s32.totalorder %s35, 1
      %p161 = por %p159, %p160
      %p163 = scmp.ne.s32.totalorder %s148, %s162
      %p164 = scmp.eq.s32.totalorder %s35, 0
      %p165 = por %p163, %p164
      %s167 = sadd.s32 %s166, 1
      %p170 = scmp.eq.s32.totalorder %s29, 1
      %p171 = scmp.ne.s32.totalorder %s166, %s168
      %p172 = scmp.eq.s32.totalorder %s29, 0
      %p173 = por %p171, %p172
      %p174 = scmp.ne.s32.totalorder %s166, %s168
      %p175 = scmp.eq.s32.totalorder %s34, 1
      %p176 = por %p174, %p175
      %p177 = scmp.ne.s32.totalorder %s168, %s169
      %p178 = scmp.eq.s32.totalorder %s34, 0
      %p179 = por %p177, %p178
      %p180 = scmp.ne.s32.totalorder %s168, %s169
      %p181 = scmp.eq.s32.totalorder %s35, 1
      %p182 = por %p180, %p181
      %p184 = scmp.ne.s32.totalorder %s169, %s183
      %p185 = scmp.eq.s32.totalorder %s35, 0
      %p186 = por %p184, %p185
      %s188 = sadd.s32 %s187, 1
      %p191 = scmp.eq.s32.totalorder %s29, 1
      %p192 = scmp.ne.s32.totalorder %s187, %s189
      %p193 = scmp.eq.s32.totalorder %s29, 0
      %p194 = por %p192, %p193
      %p195 = scmp.ne.s32.totalorder %s187, %s189
      %p196 = scmp.eq.s32.totalorder %s34, 1
      %p197 = por %p195, %p196
      %p198 = scmp.ne.s32.totalorder %s189, %s190
      %p199 = scmp.eq.s32.totalorder %s34, 0
      %p200 = por %p198, %p199
      %p201 = scmp.ne.s32.totalorder %s189, %s190
      %p202 = scmp.eq.s32.totalorder %s35, 1
      %p203 = por %p201, %p202
      %p205 = scmp.ne.s32.totalorder %s190, %s204
      %p206 = scmp.eq.s32.totalorder %s35, 0
      %p207 = por %p205, %p206
      %s209 = sadd.s32 %s208, 1
      %p212 = scmp.eq.s32.totalorder %s29, 1
      %p213 = scmp.ne.s32.totalorder %s208, %s210
      %p214 = scmp.eq.s32.totalorder %s29, 0
      %p215 = por %p213, %p214
      %p216 = scmp.ne.s32.totalorder %s208, %s210
      %p217 = scmp.eq.s32.totalorder %s34, 1
      %p218 = por %p216, %p217
      %p219 = scmp.ne.s32.totalorder %s210, %s211
      %p220 = scmp.eq.s32.totalorder %s34, 0
      %p221 = por %p219, %p220
      %p222 = scmp.ne.s32.totalorder %s210, %s211
      %p223 = scmp.eq.s32.totalorder %s35, 1
      %p224 = por %p222, %p223
      %p226 = scmp.ne.s32.totalorder %s211, %s225
      %p227 = scmp.eq.s32.totalorder %s35, 0
      %p228 = por %p226, %p227
      %s230 = sadd.s32 %s229, 1
      %p233 = scmp.eq.s32.totalorder %s29, 1
      %p234 = scmp.ne.s32.totalorder %s229, %s231
      %p235 = scmp.eq.s32.totalorder %s29, 0
      %p236 = por %p234, %p235
      %p237 = scmp.ne.s32.totalorder %s229, %s231
      %p238 = scmp.eq.s32.totalorder %s34, 1
      %p239 = por %p237, %p238
      %p240 = scmp.ne.s32.totalorder %s231, %s232
      %p241 = scmp.eq.s32.totalorder %s34, 0
      %p242 = por %p240, %p241
      %p243 = scmp.ne.s32.totalorder %s231, %s232
      %p244 = scmp.eq.s32.totalorder %s35, 1
      %p245 = por %p243, %p244
      %p247 = scmp.ne.s32.totalorder %s232, %s246
      %p248 = scmp.eq.s32.totalorder %s35, 0
      %p249 = por %p247, %p248
      %s251 = sadd.s32 %s250, 1
      %p254 = scmp.eq.s32.totalorder %s29, 1
      %p255 = scmp.ne.s32.totalorder %s250, %s252
      %p256 = scmp.eq.s32.totalorder %s29, 0
      %p257 = por %p255, %p256
      %p258 = scmp.ne.s32.totalorder %s250, %s252
      %p259 = scmp.eq.s32.totalorder %s34, 1
      %p260 = por %p258, %p259
      %p261 = scmp.ne.s32.totalorder %s252, %s253
      %p262 = scmp.eq.s32.totalorder %s34, 0
      %p263 = por %p261, %p262
      %p264 = scmp.ne.s32.totalorder %s252, %s253
      %p265 = scmp.eq.s32.totalorder %s35, 1
      %p266 = por %p264, %p265
      %p268 = scmp.ne.s32.totalorder %s253, %s267
      %p269 = scmp.eq.s32.totalorder %s35, 0
      %p270 = por %p268, %p269
      %s272 = sadd.s32 %s271, 1
      %p275 = scmp.eq.s32.totalorder %s29, 1
      %p276 = scmp.ne.s32.totalorder %s271, %s273
      %p277 = scmp.eq.s32.totalorder %s29, 0
      %p278 = por %p276, %p277
      %p279 = scmp.ne.s32.totalorder %s271, %s273
      %p280 = scmp.eq.s32.totalorder %s34, 1
      %p281 = por %p279, %p280
      %p282 = scmp.ne.s32.totalorder %s273, %s274
      %p283 = scmp.eq.s32.totalorder %s34, 0
      %p284 = por %p282, %p283
      %p285 = scmp.ne.s32.totalorder %s273, %s274
      %p286 = scmp.eq.s32.totalorder %s35, 1
      %p287 = por %p285, %p286
      %p289 = scmp.ne.s32.totalorder %s274, %s288
      %p290 = scmp.eq.s32.totalorder %s35, 0
      %p291 = por %p289, %p290
      %s293 = sadd.s32 %s292, 1
      %p296 = scmp.eq.s32.totalorder %s29, 1
      %p297 = scmp.ne.s32.totalorder %s292, %s294
      %p298 = scmp.eq.s32.totalorder %s29, 0
      %p299 = por %p297, %p298
      %p300 = scmp.ne.s32.totalorder %s292, %s294
      %p301 = scmp.eq.s32.totalorder %s34, 1
      %p302 = por %p300, %p301
      %p303 = scmp.ne.s32.totalorder %s294, %s295
      %p304 = scmp.eq.s32.totalorder %s34, 0
      %p305 = por %p303, %p304
      %p306 = scmp.ne.s32.totalorder %s294, %s295
      %p307 = scmp.eq.s32.totalorder %s35, 1
      %p308 = por %p306, %p307
      %p310 = scmp.ne.s32.totalorder %s295, %s309
      %p311 = scmp.eq.s32.totalorder %s35, 0
      %p312 = por %p310, %p311
      %s313 = ssub.s32 %s36, %s48
      %s314 = ssub.s32 %s37, %s44
      %s315 = sor.u32 %s313, %s314
      %p316 = scmp.eq.s32.totalorder %s315, 0
      %s318 = sadd.s32 %s317, 1
      %s319 = scalar_select %p316, %s317, %s318
      %p322 = pneg %p316
      %p323 = scmp.eq.s32.totalorder %s29, 1
      %p324 = por %p322, %p323
      %p325 = scmp.ne.s32.totalorder %s317, %s320
      %p326 = scmp.eq.s32.totalorder %s29, 0
      %p327 = por %p325, %p326
      %p328 = scmp.ne.s32.totalorder %s317, %s320
      %p329 = scmp.eq.s32.totalorder %s34, 1
      %p330 = por %p328, %p329
      %p331 = scmp.ne.s32.totalorder %s320, %s321
      %p332 = scmp.eq.s32.totalorder %s34, 0
      %p333 = por %p331, %p332
      %p334 = scmp.ne.s32.totalorder %s320, %s321
      %p335 = scmp.eq.s32.totalorder %s35, 1
      %p336 = por %p334, %p335
      %p338 = scmp.ne.s32.totalorder %s321, %s337
      %p339 = scmp.eq.s32.totalorder %s35, 0
      %p340 = por %p338, %p339
      %p341 = scmp.le.s32.totalorder 1, %s29
      %p342 = scmp.lt.s32.totalorder %s29, 3
      %p343 = pnand %p341, %p342
      %p344 = pneg %p343
      // Predicated region
      $region9: #{tpu_custom_call.1} parent=5 // pred_check
        _
      $region10: #{tpu_custom_call.1} parent=5 // pred_check_branch
        %346 = sbr.rel (%p343) target = $region12
      $region11: #{tpu_custom_call.1} parent=5 // pred_region
        %s347 = ssub.s32 %s29, 1
        // Predicated region
        $region13: #{tpu_custom_call.1} parent=11 // pred_check
          %p348 = pneg %p116
        $region14: #{tpu_custom_call.1} parent=11 // pred_check_branch
          %350 = sbr.rel (%p348) target = $region16
        $region15: #{tpu_custom_call.1} parent=11 // pred_region
          %s352 = ssub.s32 256, 256
          %353 = vsyncadd [#allocation9], %s352
          %s354 = sshll.u32 [#allocation10], 4
          %s355 = int_to_ptr.vmem [resolvable:$true] %s354
          %360 = dma.hbm_to_vmem [thread:$0]  %s2, 256, %s355, [#allocation9], 64, 64, 4
        $region16: #{tpu_custom_call.1} parent=11 // pred_fallthru
          _
        // Predicated region
        $region17: #{tpu_custom_call.1} parent=11 // pred_check
          %p361 = pneg %p137
        $region18: #{tpu_custom_call.1} parent=11 // pred_check_branch
          %363 = sbr.rel (%p361) target = $region20
        $region19: #{tpu_custom_call.1} parent=11 // pred_region
          _
        $region20: #{tpu_custom_call.1} parent=11 // pred_fallthru
          _
        // Predicated region
        $region21: #{tpu_custom_call.1} parent=11 // pred_check
          %p364 = pneg %p158
        $region22: #{tpu_custom_call.1} parent=11 // pred_check_branch
          %366 = sbr.rel (%p364) target = $region24
        $region23: #{tpu_custom_call.1} parent=11 // pred_region
          %s368 = ssub.s32 256, 256
          %369 = vsyncadd [#allocation12], %s368
          %s370 = sshll.u32 [#allocation11], 4
          %s371 = int_to_ptr.vmem [resolvable:$true] %s370
          %376 = dma.hbm_to_vmem [thread:$0]  %s4, 256, %s371, [#allocation12], 64, 64, 4
        $region24: #{tpu_custom_call.1} parent=11 // pred_fallthru
          _
        // Predicated region
        $region25: #{tpu_custom_call.1} parent=11 // pred_check
          %p377 = pneg %p179
        $region26: #{tpu_custom_call.1} parent=11 // pred_check_branch
          %379 = sbr.rel (%p377) target = $region28
        $region27: #{tpu_custom_call.1} parent=11 // pred_region
          _
        $region28: #{tpu_custom_call.1} parent=11 // pred_fallthru
          _
        // Predicated region
        $region29: #{tpu_custom_call.1} parent=11 // pred_check
          %p380 = pneg %p200
        $region30: #{tpu_custom_call.1} parent=11 // pred_check_branch
          %382 = sbr.rel (%p380) target = $region32
        $region31: #{tpu_custom_call.1} parent=11 // pred_region
          %s384 = ssub.s32 256, 256
          %385 = vsyncadd [#allocation12], %s384
          %s386 = sshll.u32 [#allocation13], 4
          %s387 = int_to_ptr.vmem [resolvable:$true] %s386
          %392 = dma.hbm_to_vmem [thread:$0]  %s6, 256, %s387, [#allocation12], 64, 64, 4
        $region32: #{tpu_custom_call.1} parent=11 // pred_fallthru
          _
        // Predicated region
        $region33: #{tpu_custom_call.1} parent=11 // pred_check
          %p393 = pneg %p221
        $region34: #{tpu_custom_call.1} parent=11 // pred_check_branch
          %395 = sbr.rel (%p393) target = $region36
        $region35: #{tpu_custom_call.1} parent=11 // pred_region
          _
        $region36: #{tpu_custom_call.1} parent=11 // pred_fallthru
          _
        // Predicated region
        $region37: #{tpu_custom_call.1} parent=11 // pred_check
          %p396 = pneg %p242
        $region38: #{tpu_custom_call.1} parent=11 // pred_check_branch
          %398 = sbr.rel (%p396) target = $region40
        $region39: #{tpu_custom_call.1} parent=11 // pred_region
          %s400 = ssub.s32 256, 256
          %401 = vsyncadd [#allocation15], %s400
          %s402 = sshll.u32 [#allocation14], 4
          %s403 = int_to_ptr.vmem [resolvable:$true] %s402
          %408 = dma.hbm_to_vmem [thread:$0]  %s8, 256, %s403, [#allocation15], 64, 64, 4
        $region40: #{tpu_custom_call.1} parent=11 // pred_fallthru
          _
        // Predicated region
        $region41: #{tpu_custom_call.1} parent=11 // pred_check
          %p409 = pneg %p263
        $region42: #{tpu_custom_call.1} parent=11 // pred_check_branch
          %411 = sbr.rel (%p409) target = $region44
        $region43: #{tpu_custom_call.1} parent=11 // pred_region
          _
        $region44: #{tpu_custom_call.1} parent=11 // pred_fallthru
          _
        // Predicated region
        $region45: #{tpu_custom_call.1} parent=11 // pred_check
          %p412 = pneg %p284
        $region46: #{tpu_custom_call.1} parent=11 // pred_check_branch
          %414 = sbr.rel (%p412) target = $region48
        $region47: #{tpu_custom_call.1} parent=11 // pred_region
          _
        $region48: #{tpu_custom_call.1} parent=11 // pred_fallthru
          _
        // Predicated region
        $region49: #{tpu_custom_call.1} parent=11 // pred_check
          %p415 = pneg %p305
        $region50: #{tpu_custom_call.1} parent=11 // pred_check_branch
          %417 = sbr.rel (%p415) target = $region52
        $region51: #{tpu_custom_call.1} parent=11 // pred_region
          _
        $region52: #{tpu_custom_call.1} parent=11 // pred_fallthru
          _
      $region12: #{tpu_custom_call.1} parent=5 // pred_fallthru
        _
      %p418 = scmp.lt.s32.totalorder %s29, 2
      // Predicated region
      $region53: #{tpu_custom_call.1} parent=5 // pred_check
        %p419 = pneg %p418
      $region54: #{tpu_custom_call.1} parent=5 // pred_check_branch
        %421 = sbr.rel (%p419) target = $region56
      $region55: #{tpu_custom_call.1} parent=5 // pred_region
        // Predicated region
        $region57: #{tpu_custom_call.1} parent=55 // pred_check
          %p422 = pneg %p63
        $region58: #{tpu_custom_call.1} parent=55 // pred_check_branch
          %424 = sbr.rel (%p422) target = $region60
        $region59: #{tpu_custom_call.1} parent=55 // pred_region
          %s425 = sand.u32 %s53, 1
          %s426 = scalar_lea.sflag [#allocation6], %s425
          %s427 = sand.u32 %s53, 1
          %s428 = smul.addr %s427, 4
          %s429 = scalar_lea.vmem [#allocation5], %s428
          %s431 = ssub.s32 64, 64
          %432 = vsyncadd %s426, %s431
          %s433 = sadd.s32 %s37, %s36
          %s434 = smul.addr %s433, 64
          %s435 = scalar_lea.hbm %s0, %s434
          %s437 = sshll.u32 %s429, 4
          %s438 = int_to_ptr.vmem [resolvable:$true] %s437
          %440 = dma.hbm_to_vmem [thread:$0]  %s435, 64, %s438, %s426
        $region60: #{tpu_custom_call.1} parent=55 // pred_fallthru
          _
        // Predicated region
        $region61: #{tpu_custom_call.1} parent=55 // pred_check
          %p441 = pneg %p89
        $region62: #{tpu_custom_call.1} parent=55 // pred_check_branch
          %443 = sbr.rel (%p441) target = $region64
        $region63: #{tpu_custom_call.1} parent=55 // pred_region
          %s444 = sand.u32 %s29, 1
          %s445 = scalar_lea.sflag [#allocation9], %s444
          %s446 = sand.u32 %s79, 1
          %s447 = smul.addr %s446, 4
          %s448 = scalar_lea.vmem [#allocation8], %s447
          %s450 = ssub.s32 64, 64
          %451 = vsyncadd %s445, %s450
          %s452 = smul.addr %s36, 64
          %s453 = scalar_lea.hbm %s1, %s452
          %s455 = sshll.u32 %s448, 4
          %s456 = int_to_ptr.vmem [resolvable:$true] %s455
          %458 = dma.hbm_to_vmem [thread:$0]  %s453, 64, %s456, %s445
        $region64: #{tpu_custom_call.1} parent=55 // pred_fallthru
          _
      $region56: #{tpu_custom_call.1} parent=5 // pred_fallthru
        _
      %p459 = scmp.le.s32.totalorder 1, %s29
      %p460 = scmp.lt.s32.totalorder %s29, 3
      %p461 = pnand %p459, %p460
      %p462 = pneg %p461
      // Predicated region
      $region65: #{tpu_custom_call.1} parent=5 // pred_check
        _
      $region66: #{tpu_custom_call.1} parent=5 // pred_check_branch
        %464 = sbr.rel (%p461) target = $region68
      $region67: #{tpu_custom_call.1} parent=5 // pred_region
        %s465 = ssub.s32 %s29, 1
        %s466 = sand.u32 %s56, 1
        %s467 = scalar_lea.sflag [#allocation6], %s466
        %s468 = sand.u32 %s56, 1
        %s469 = smul.addr %s468, 4
        %s470 = scalar_lea.vmem [#allocation5], %s469
        // Predicated region
        $region69: #{tpu_custom_call.1} parent=67 // pred_check
          %p471 = pneg %p69
        $region70: #{tpu_custom_call.1} parent=67 // pred_check_branch
          %473 = sbr.rel (%p471) target = $region72
        $region71: #{tpu_custom_call.1} parent=67 // pred_region
          %474 = dma.done %s467, 64
        $region72: #{tpu_custom_call.1} parent=67 // pred_fallthru
          _
        %s475 = sand.u32 %s34, 1
        %s476 = scalar_lea.sflag [#allocation9], %s475
        %s477 = sand.u32 %s82, 1
        %s478 = smul.addr %s477, 4
        %s479 = scalar_lea.vmem [#allocation8], %s478
        // Predicated region
        $region73: #{tpu_custom_call.1} parent=67 // pred_check
          %p480 = pneg %p95
        $region74: #{tpu_custom_call.1} parent=67 // pred_check_branch
          %482 = sbr.rel (%p480) target = $region76
        $region75: #{tpu_custom_call.1} parent=67 // pred_region
          %483 = dma.done %s476, 64
        $region76: #{tpu_custom_call.1} parent=67 // pred_fallthru
          _
        // Predicated region
        $region77: #{tpu_custom_call.1} parent=67 // pred_check
          %p484 = pneg %p116
        $region78: #{tpu_custom_call.1} parent=67 // pred_check_branch
          %486 = sbr.rel (%p484) target = $region80
        $region79: #{tpu_custom_call.1} parent=67 // pred_region
          %487 = dma.done [#allocation9], 256
        $region80: #{tpu_custom_call.1} parent=67 // pred_fallthru
          _
        // Predicated region
        $region81: #{tpu_custom_call.1} parent=67 // pred_check
          %p488 = pneg %p158
        $region82: #{tpu_custom_call.1} parent=67 // pred_check_branch
          %490 = sbr.rel (%p488) target = $region84
        $region83: #{tpu_custom_call.1} parent=67 // pred_region
          %491 = dma.done [#allocation12], 256
        $region84: #{tpu_custom_call.1} parent=67 // pred_fallthru
          _
        // Predicated region
        $region85: #{tpu_custom_call.1} parent=67 // pred_check
          %p492 = pneg %p200
        $region86: #{tpu_custom_call.1} parent=67 // pred_check_branch
          %494 = sbr.rel (%p492) target = $region88
        $region87: #{tpu_custom_call.1} parent=67 // pred_region
          %495 = dma.done [#allocation12], 256
        $region88: #{tpu_custom_call.1} parent=67 // pred_fallthru
          _
        // Predicated region
        $region89: #{tpu_custom_call.1} parent=67 // pred_check
          %p496 = pneg %p242
        $region90: #{tpu_custom_call.1} parent=67 // pred_check_branch
          %498 = sbr.rel (%p496) target = $region92
        $region91: #{tpu_custom_call.1} parent=67 // pred_region
          %499 = dma.done [#allocation15], 256
        $region92: #{tpu_custom_call.1} parent=67 // pred_fallthru
          _
        %s500 = sand.u32 %s56, 1
        %s501 = scalar_lea.sflag [#allocation6], %s500
        %s502 = sand.u32 %s56, 1
        %s503 = smul.addr %s502, 4
        %s504 = scalar_lea.vmem [#allocation5], %s503
        %p505 = pneg %p69
        %p506 = pneg %p66
        %s507 = sand.u32 %s34, 1
        %s508 = scalar_lea.sflag [#allocation9], %s507
        %s509 = sand.u32 %s82, 1
        %s510 = smul.addr %s509, 4
        %s511 = scalar_lea.vmem [#allocation8], %s510
        %p512 = pneg %p95
        %p513 = pneg %p92
        %p514 = pneg %p116
        %p515 = pneg %p113
        %p516 = pneg %p137
        %p517 = pneg %p134
        %p518 = pneg %p158
        %p519 = pneg %p155
        %p520 = pneg %p179
        %p521 = pneg %p176
        %p522 = pneg %p200
        %p523 = pneg %p197
        %p524 = pneg %p221
        %p525 = pneg %p218
        %p526 = pneg %p242
        %p527 = pneg %p239
        %p528 = pneg %p263
        %p529 = pneg %p260
        %p530 = pneg %p284
        %p531 = pneg %p281
        %p532 = pneg %p305
        %p533 = pneg %p302
        %p534 = pneg %p333
        %p535 = pneg %p330
        %s536 = sand.u32 %s320, 1
        %s537 = scalar_lea.sflag [#allocation7], %s536
        %s538 = sand.u32 %s320, 1
        %s539 = smul.addr %s538, 4
        %s540 = scalar_lea.vmem [#allocation16], %s539
        %p542 = scmp.eq.s32.totalorder %s39, 0
        // Predicated region
        $region93: #{tpu_custom_call.1} parent=67 // pred_check
          %p543 = pneg %p542
        $region94: #{tpu_custom_call.1} parent=67 // pred_check_branch
          %545 = sbr.rel (%p543) target = $region96
        $region95: #{tpu_custom_call.1} parent=67 // pred_region
          %v546 = vld [vmem:[%s479] sm:$0xf]
          %v547 = vld [vmem:[#allocation11] sm:$0xf]
          %v548 = vld [vmem:[#allocation11 + $0x4] sm:$0xf]
          %v549 = vld [vmem:[#allocation11 + $0x8] sm:$0xf]
          %v550 = vld [vmem:[#allocation11 + $0xc] sm:$0xf]
          %v551 = vld [vmem:[%s5] sm:$0x1]
          %v553 = vlaneseq
          %v554 = vshrl.u32 %v553, 7
          %v555 = vsub.s32 0, %v554
          %v556 = vrot.slane %v551, %v555
          %v562 = vunpack.c.l.b16 %v547
          %v563 = vunpack.c.l.b16 %v548
          %v564 = vunpack.c.l.b16 %v549
          %v565 = vunpack.c.l.b16 %v550
          %v566 = vpack.c.b16 %v563, %v562
          %v567 = vpack.c.b16 %v565, %v564
          %vm570 = vcmask 261120
          %v572 = vsel %vm570, %v546, 0
          %574 = vmatprep.subr.bf16.mxu0 0
          %575 = vmatpush1.bf16.msra.mxu0 0
          %576 = vmatprep.subr.bf16.mxu0 0
          %577 = vmatpush1.bf16.msra.mxu0 0
          %578 = vmatprep.subr.bf16.mxu0 0
          %579 = vmatpush1.bf16.msra.mxu0 0
          %580 = vmatprep.subr.bf16.mxu0 0
          %581 = vmatpush1.bf16.msra.mxu0 0
          %582 = vmatprep.subr.bf16.mxu0 0
          %583 = vmatpush1.bf16.msra.mxu0 0
          %584 = vmatprep.subr.bf16.mxu0 0
          %585 = vmatpush1.bf16.msra.mxu0 0
          %586 = vmatprep.subr.bf16.mxu0 0
          %587 = vmatpush1.bf16.msra.mxu0 %v567
          %588 = vmatprep.subr.bf16.mxu0 0
          %589 = vmatpush1.bf16.msra.mxu0 %v566
          %590 = vmatprep.subr.bf16.mxu0 0
          %591 = vmatpush2.bf16.msra.mxu0 0
          %592 = vmatprep.subr.bf16.mxu0 0
          %593 = vmatpush2.bf16.msra.mxu0 0
          %594 = vmatprep.subr.bf16.mxu0 0
          %595 = vmatpush2.bf16.msra.mxu0 0
          %596 = vmatprep.subr.bf16.mxu0 0
          %597 = vmatpush2.bf16.msra.mxu0 0
          %598 = vmatprep.subr.bf16.mxu0 0
          %599 = vmatpush2.bf16.msra.mxu0 0
          %600 = vmatprep.subr.bf16.mxu0 0
          %601 = vmatpush2.bf16.msra.mxu0 0
          %602 = vmatprep.subr.bf16.mxu0 0
          %603 = vmatpush2.bf16.msra.mxu0 0
          %604 = vmatprep.subr.bf16.mxu0 0
          %605 = vmatpush2.bf16.msra.mxu0 0
          %606 = vmatprep.mubr.bf16.mxu0 0
          %607 = vmatmul.mubr.bf16.gmra.mxu0 %v572
          %v608 = vpop.f32.mrf.mxu0
          %v609 = vadd.f32 %v556, %v608
          %v610 = vpop.f32.mrf.mxu0
          %v611 = vpop.f32.mrf.mxu0
          %v612 = vpop.f32.mrf.mxu0
          %613 = vdwg.mxu0
          %v614 = vpack.c.bf16 %v609, %v609
          %vm615 = vcmask 257024
          %616 = vst.msk [vmem:[#allocation2] sm:$0xf] %vm615, %v614
          %v617 = vld [vmem:[#allocation13] sm:$0xf]
          %v618 = vld [vmem:[#allocation13 + $0x4] sm:$0xf]
          %v619 = vld [vmem:[#allocation13 + $0x8] sm:$0xf]
          %v620 = vld [vmem:[#allocation13 + $0xc] sm:$0xf]
          %v621 = vld [vmem:[%s7] sm:$0x1]
          %v623 = vlaneseq
          %v624 = vshrl.u32 %v623, 7
          %v625 = vsub.s32 0, %v624
          %v626 = vrot.slane %v621, %v625
          %v632 = vunpack.c.l.b16 %v617
          %v633 = vunpack.c.l.b16 %v618
          %v634 = vunpack.c.l.b16 %v619
          %v635 = vunpack.c.l.b16 %v620
          %v636 = vpack.c.b16 %v633, %v632
          %v637 = vpack.c.b16 %v635, %v634
          %640 = vmatprep.subr.bf16.mxu0 0
          %641 = vmatpush1.bf16.msra.mxu0 0
          %642 = vmatprep.subr.bf16.mxu0 0
          %643 = vmatpush1.bf16.msra.mxu0 0
          %644 = vmatprep.subr.bf16.mxu0 0
          %645 = vmatpush1.bf16.msra.mxu0 0
          %646 = vmatprep.subr.bf16.mxu0 0
          %647 = vmatpush1.bf16.msra.mxu0 0
          %648 = vmatprep.subr.bf16.mxu0 0
          %649 = vmatpush1.bf16.msra.mxu0 0
          %650 = vmatprep.subr.bf16.mxu0 0
          %651 = vmatpush1.bf16.msra.mxu0 0
          %652 = vmatprep.subr.bf16.mxu0 0
          %653 = vmatpush1.bf16.msra.mxu0 %v637
          %654 = vmatprep.subr.bf16.mxu0 0
          %655 = vmatpush1.bf16.msra.mxu0 %v636
          %656 = vmatprep.subr.bf16.mxu0 0
          %657 = vmatpush2.bf16.msra.mxu0 0
          %658 = vmatprep.subr.bf16.mxu0 0
          %659 = vmatpush2.bf16.msra.mxu0 0
          %660 = vmatprep.subr.bf16.mxu0 0
          %661 = vmatpush2.bf16.msra.mxu0 0
          %662 = vmatprep.subr.bf16.mxu0 0
          %663 = vmatpush2.bf16.msra.mxu0 0
          %664 = vmatprep.subr.bf16.mxu0 0
          %665 = vmatpush2.bf16.msra.mxu0 0
          %666 = vmatprep.subr.bf16.mxu0 0
          %667 = vmatpush2.bf16.msra.mxu0 0
          %668 = vmatprep.subr.bf16.mxu0 0
          %669 = vmatpush2.bf16.msra.mxu0 0
          %670 = vmatprep.subr.bf16.mxu0 0
          %671 = vmatpush2.bf16.msra.mxu0 0
          %672 = vmatprep.mubr.bf16.mxu0 0
          %673 = vmatmul.mubr.bf16.gmra.mxu0 %v572
          %v674 = vpop.f32.mrf.mxu0
          %v675 = vadd.f32 %v626, %v674
          %v676 = vpop.f32.mrf.mxu0
          %v677 = vpop.f32.mrf.mxu0
          %v678 = vpop.f32.mrf.mxu0
          %679 = vdwg.mxu0
          %v680 = vpack.c.bf16 %v675, %v675
          %681 = vst.msk [vmem:[#allocation3] sm:$0xf] %vm615, %v680
        $region96: #{tpu_custom_call.1} parent=67 // pred_fallthru
          _
        %v682 = vld [vmem:[%s470] sm:$0xf]
        %v683 = vunpack.c.l.bf16 %v682
        %v684 = vld [vmem:[#allocation10] sm:$0xf]
        %v685 = vld [vmem:[#allocation10 + $0x4] sm:$0xf]
        %v686 = vld [vmem:[#allocation10 + $0x8] sm:$0xf]
        %v687 = vld [vmem:[#allocation10 + $0xc] sm:$0xf]
        %v688 = vld [vmem:[%s3] sm:$0x1]
        %v690 = vlaneseq
        %v691 = vshrl.u32 %v690, 7
        %v692 = vsub.s32 0, %v691
        %v693 = vrot.slane %v688, %v692
        %v699 = vunpack.c.l.b16 %v684
        %v700 = vunpack.c.l.b16 %v685
        %v701 = vunpack.c.l.b16 %v686
        %v702 = vunpack.c.l.b16 %v687
        %v703 = vpack.c.b16 %v700, %v699
        %v704 = vpack.c.b16 %v702, %v701
        %vm707 = vcmask 261120
        %v709 = vsel %vm707, %v682, 0
        %711 = vmatprep.subr.bf16.mxu0 0
        %712 = vmatpush1.bf16.msra.mxu0 0
        %713 = vmatprep.subr.bf16.mxu0 0
        %714 = vmatpush1.bf16.msra.mxu0 0
        %715 = vmatprep.subr.bf16.mxu0 0
        %716 = vmatpush1.bf16.msra.mxu0 0
        %717 = vmatprep.subr.bf16.mxu0 0
        %718 = vmatpush1.bf16.msra.mxu0 0
        %719 = vmatprep.subr.bf16.mxu0 0
        %720 = vmatpush1.bf16.msra.mxu0 0
        %721 = vmatprep.subr.bf16.mxu0 0
        %722 = vmatpush1.bf16.msra.mxu0 0
        %723 = vmatprep.subr.bf16.mxu0 0
        %724 = vmatpush1.bf16.msra.mxu0 %v704
        %725 = vmatprep.subr.bf16.mxu0 0
        %726 = vmatpush1.bf16.msra.mxu0 %v703
        %727 = vmatprep.subr.bf16.mxu0 0
        %728 = vmatpush2.bf16.msra.mxu0 0
        %729 = vmatprep.subr.bf16.mxu0 0
        %730 = vmatpush2.bf16.msra.mxu0 0
        %731 = vmatprep.subr.bf16.mxu0 0
        %732 = vmatpush2.bf16.msra.mxu0 0
        %733 = vmatprep.subr.bf16.mxu0 0
        %734 = vmatpush2.bf16.msra.mxu0 0
        %735 = vmatprep.subr.bf16.mxu0 0
        %736 = vmatpush2.bf16.msra.mxu0 0
        %737 = vmatprep.subr.bf16.mxu0 0
        %738 = vmatpush2.bf16.msra.mxu0 0
        %739 = vmatprep.subr.bf16.mxu0 0
        %740 = vmatpush2.bf16.msra.mxu0 0
        %741 = vmatprep.subr.bf16.mxu0 0
        %742 = vmatpush2.bf16.msra.mxu0 0
        %743 = vmatprep.mubr.bf16.mxu0 0
        %744 = vmatmul.mubr.bf16.gmra.mxu0 %v709
        %v745 = vpop.f32.mrf.mxu0
        %v746 = vadd.f32 %v693, %v745
        %v747 = vpop.f32.mrf.mxu0
        %v748 = vpop.f32.mrf.mxu0
        %v749 = vpop.f32.mrf.mxu0
        %750 = vdwg.mxu0
        %v751 = vpack.c.bf16 %v746, %v746
        %s752 = smul.u32 %s39, 8
        %v753 = vlaneseq
        %v754 = vshrl.u32 %v753, 7
        %v755 = vstv %s752
        %v756 = vadd.s32 %v755, %v754
        %v757 = vlaneseq
        %v758 = vand.u32 %v757, 127
        %vm759 = vcmp.le.s32.totalorder %v758, %v756
        %v760 = vsel %vm759, 0.0, -1e+30
        %v761 = vld [vmem:[#allocation2] sm:$0xf]
        %vm762 = vcmask 64512
        %v764 = vsel %vm762, %v751, 0
        %v767 = vsel %vm762, %v761, 0
        %769 = vmatprep.subr.bf16.mxu0 0
        %770 = vmatpush1.bf16.xpose.msra.mxu0 0
        %771 = vmatprep.subr.bf16.mxu0 0
        %772 = vmatpush1.bf16.xpose.msra.mxu0 0
        %773 = vmatprep.subr.bf16.mxu0 0
        %774 = vmatpush1.bf16.xpose.msra.mxu0 0
        %775 = vmatprep.subr.bf16.mxu0 0
        %776 = vmatpush1.bf16.xpose.msra.mxu0 0
        %777 = vmatprep.subr.bf16.mxu0 0
        %778 = vmatpush1.bf16.xpose.msra.mxu0 0
        %779 = vmatprep.subr.bf16.mxu0 0
        %780 = vmatpush1.bf16.xpose.msra.mxu0 0
        %781 = vmatprep.subr.bf16.mxu0 0
        %782 = vmatpush1.bf16.xpose.msra.mxu0 0
        %783 = vmatprep.subr.bf16.mxu0 0
        %784 = vmatpush1.bf16.xpose.msra.mxu0 %v767
        %785 = vmatprep.subr.bf16.mxu0 0
        %786 = vmatpush2.bf16.xpose.msra.mxu0 0
        %787 = vmatprep.subr.bf16.mxu0 0
        %788 = vmatpush2.bf16.xpose.msra.mxu0 0
        %789 = vmatprep.subr.bf16.mxu0 0
        %790 = vmatpush2.bf16.xpose.msra.mxu0 0
        %791 = vmatprep.subr.bf16.mxu0 0
        %792 = vmatpush2.bf16.xpose.msra.mxu0 0
        %793 = vmatprep.subr.bf16.mxu0 0
        %794 = vmatpush2.bf16.xpose.msra.mxu0 0
        %795 = vmatprep.subr.bf16.mxu0 0
        %796 = vmatpush2.bf16.xpose.msra.mxu0 0
        %797 = vmatprep.subr.bf16.mxu0 0
        %798 = vmatpush2.bf16.xpose.msra.mxu0 0
        %799 = vmatprep.subr.bf16.mxu0 0
        %800 = vmatpush2.bf16.xpose.msra.mxu0 0
        %801 = vmatprep.mubr.bf16.mxu0 0
        %802 = vmatmul.mubr.bf16.gmra.mxu0 %v764
        %v803 = vpop.f32.mrf.mxu0
        %v804 = vadd.f32 %v760, %v803
        %v805 = vpop.f32.mrf.mxu0
        %v806 = vpop.f32.mrf.mxu0
        %v807 = vpop.f32.mrf.mxu0
        %808 = vdwg.mxu0
        %v809 = vsel %vm762, %v804, -inf
        %810 = vmax.xlane.f32.xlu0 %v809
        %v811 = vpop.xlane.xlu0 %810
        %v812 = vsub.f32 %v804, %v811
        %v813 = vmul.f32 %v812, 1.442695
        %v814 = vpow.pop %v813
        %v815 = vsel %vm762, %v814, 0.0
        %816 = vadd.xlane.f32.xlu0 %v815
        %v817 = vpop.xlane.xlu0 %816
        %v818 = vrcp.pop %v817
        %v819 = vmul.f32 %v814, %v818
        %v820 = vpack.c.bf16 %v819, %v819
        %v821 = vld [vmem:[#allocation3] sm:$0xf]
        %v823 = vsel %vm762, %v820, 0
        %vm825 = vcmask 1043456
        %v827 = vsel %vm825, %v821, 0
        %829 = vmatprep.subr.bf16.mxu0 0
        %830 = vmatpush1.bf16.msra.mxu0 0
        %831 = vmatprep.subr.bf16.mxu0 0
        %832 = vmatpush1.bf16.msra.mxu0 0
        %833 = vmatprep.subr.bf16.mxu0 0
        %834 = vmatpush1.bf16.msra.mxu0 0
        %835 = vmatprep.subr.bf16.mxu0 0
        %836 = vmatpush1.bf16.msra.mxu0 0
        %837 = vmatprep.subr.bf16.mxu0 0
        %838 = vmatpush1.bf16.msra.mxu0 0
        %839 = vmatprep.subr.bf16.mxu0 0
        %840 = vmatpush1.bf16.msra.mxu0 0
        %841 = vmatprep.subr.bf16.mxu0 0
        %842 = vmatpush1.bf16.msra.mxu0 0
        %843 = vmatprep.subr.bf16.mxu0 0
        %844 = vmatpush1.bf16.msra.mxu0 %v827
        %845 = vmatprep.subr.bf16.mxu0 0
        %846 = vmatpush2.bf16.msra.mxu0 0
        %847 = vmatprep.subr.bf16.mxu0 0
        %848 = vmatpush2.bf16.msra.mxu0 0
        %849 = vmatprep.subr.bf16.mxu0 0
        %850 = vmatpush2.bf16.msra.mxu0 0
        %851 = vmatprep.subr.bf16.mxu0 0
        %852 = vmatpush2.bf16.msra.mxu0 0
        %853 = vmatprep.subr.bf16.mxu0 0
        %854 = vmatpush2.bf16.msra.mxu0 0
        %855 = vmatprep.subr.bf16.mxu0 0
        %856 = vmatpush2.bf16.msra.mxu0 0
        %857 = vmatprep.subr.bf16.mxu0 0
        %858 = vmatpush2.bf16.msra.mxu0 0
        %859 = vmatprep.subr.bf16.mxu0 0
        %860 = vmatpush2.bf16.msra.mxu0 0
        %861 = vmatprep.mubr.bf16.mxu0 0
        %862 = vmatmul.mubr.bf16.gmra.mxu0 %v823
        %v863 = vpop.f32.mrf.mxu0
        %v864 = vadd.f32 0.0, %v863
        %v865 = vpop.f32.mrf.mxu0
        %v866 = vpop.f32.mrf.mxu0
        %v867 = vpop.f32.mrf.mxu0
        %868 = vdwg.mxu0
        %v869 = vpack.c.bf16 %v864, %v864
        %vm870 = vcmask 60416
        %871 = vst.msk [vmem:[#allocation4] sm:$0xf] %vm870, %v869
        %v872 = vld [vmem:[#allocation2] sm:$0xf]
        %874 = vrot.lane.b32.xlu0 %v751, 120
        %v875 = vpop.permute.xlu0 %874
        %v877 = vunpack.c.l.b16 %v872
        %v878 = vpack.c.b16 %v877, %v877
        %879 = vrot.lane.b32.xlu0 %v878, 120
        %v880 = vpop.permute.xlu0 %879
        %v882 = vsel %vm762, %v875, 0
        %v885 = vsel %vm762, %v880, 0
        %887 = vmatprep.subr.bf16.mxu0 0
        %888 = vmatpush1.bf16.xpose.msra.mxu0 0
        %889 = vmatprep.subr.bf16.mxu0 0
        %890 = vmatpush1.bf16.xpose.msra.mxu0 0
        %891 = vmatprep.subr.bf16.mxu0 0
        %892 = vmatpush1.bf16.xpose.msra.mxu0 0
        %893 = vmatprep.subr.bf16.mxu0 0
        %894 = vmatpush1.bf16.xpose.msra.mxu0 0
        %895 = vmatprep.subr.bf16.mxu0 0
        %896 = vmatpush1.bf16.xpose.msra.mxu0 0
        %897 = vmatprep.subr.bf16.mxu0 0
        %898 = vmatpush1.bf16.xpose.msra.mxu0 0
        %899 = vmatprep.subr.bf16.mxu0 0
        %900 = vmatpush1.bf16.xpose.msra.mxu0 0
        %901 = vmatprep.subr.bf16.mxu0 0
        %902 = vmatpush1.bf16.xpose.msra.mxu0 %v885
        %903 = vmatprep.subr.bf16.mxu0 0
        %904 = vmatpush2.bf16.xpose.msra.mxu0 0
        %905 = vmatprep.subr.bf16.mxu0 0
        %906 = vmatpush2.bf16.xpose.msra.mxu0 0
        %907 = vmatprep.subr.bf16.mxu0 0
        %908 = vmatpush2.bf16.xpose.msra.mxu0 0
        %909 = vmatprep.subr.bf16.mxu0 0
        %910 = vmatpush2.bf16.xpose.msra.mxu0 0
        %911 = vmatprep.subr.bf16.mxu0 0
        %912 = vmatpush2.bf16.xpose.msra.mxu0 0
        %913 = vmatprep.subr.bf16.mxu0 0
        %914 = vmatpush2.bf16.xpose.msra.mxu0 0
        %915 = vmatprep.subr.bf16.mxu0 0
        %916 = vmatpush2.bf16.xpose.msra.mxu0 0
        %917 = vmatprep.subr.bf16.mxu0 0
        %918 = vmatpush2.bf16.xpose.msra.mxu0 0
        %919 = vmatprep.mubr.bf16.mxu0 0
        %920 = vmatmul.mubr.bf16.gmra.mxu0 %v882
        %v921 = vpop.f32.mrf.mxu0
        %v922 = vadd.f32 %v760, %v921
        %v923 = vpop.f32.mrf.mxu0
        %v924 = vpop.f32.mrf.mxu0
        %v925 = vpop.f32.mrf.mxu0
        %926 = vdwg.mxu0
        %v927 = vsel %vm762, %v922, -inf
        %928 = vmax.xlane.f32.xlu0 %v927
        %v929 = vpop.xlane.xlu0 %928
        %v930 = vsub.f32 %v922, %v929
        %v931 = vmul.f32 %v930, 1.442695
        %v932 = vpow.pop %v931
        %v933 = vsel %vm762, %v932, 0.0
        %934 = vadd.xlane.f32.xlu0 %v933
        %v935 = vpop.xlane.xlu0 %934
        %v936 = vrcp.pop %v935
        %v937 = vmul.f32 %v932, %v936
        %v938 = vpack.c.bf16 %v937, %v937
        %v939 = vld [vmem:[#allocation3] sm:$0xf]
        %v941 = vunpack.c.l.b16 %v939
        %v942 = vpack.c.b16 %v941, %v941
        %943 = vrot.lane.b32.xlu0 %v942, 120
        %v944 = vpop.permute.xlu0 %943
        %v946 = vsel %vm762, %v938, 0
        %v949 = vsel %vm825, %v944, 0
        %951 = vmatprep.subr.bf16.mxu0 0
        %952 = vmatpush1.bf16.msra.mxu0 0
        %953 = vmatprep.subr.bf16.mxu0 0
        %954 = vmatpush1.bf16.msra.mxu0 0
        %955 = vmatprep.subr.bf16.mxu0 0
        %956 = vmatpush1.bf16.msra.mxu0 0
        %957 = vmatprep.subr.bf16.mxu0 0
        %958 = vmatpush1.bf16.msra.mxu0 0
        %959 = vmatprep.subr.bf16.mxu0 0
        %960 = vmatpush1.bf16.msra.mxu0 0
        %961 = vmatprep.subr.bf16.mxu0 0
        %962 = vmatpush1.bf16.msra.mxu0 0
        %963 = vmatprep.subr.bf16.mxu0 0
        %964 = vmatpush1.bf16.msra.mxu0 0
        %965 = vmatprep.subr.bf16.mxu0 0
        %966 = vmatpush1.bf16.msra.mxu0 %v949
        %967 = vmatprep.subr.bf16.mxu0 0
        %968 = vmatpush2.bf16.msra.mxu0 0
        %969 = vmatprep.subr.bf16.mxu0 0
        %970 = vmatpush2.bf16.msra.mxu0 0
        %971 = vmatprep.subr.bf16.mxu0 0
        %972 = vmatpush2.bf16.msra.mxu0 0
        %973 = vmatprep.subr.bf16.mxu0 0
        %974 = vmatpush2.bf16.msra.mxu0 0
        %975 = vmatprep.subr.bf16.mxu0 0
        %976 = vmatpush2.bf16.msra.mxu0 0
        %977 = vmatprep.subr.bf16.mxu0 0
        %978 = vmatpush2.bf16.msra.mxu0 0
        %979 = vmatprep.subr.bf16.mxu0 0
        %980 = vmatpush2.bf16.msra.mxu0 0
        %981 = vmatprep.subr.bf16.mxu0 0
        %982 = vmatpush2.bf16.msra.mxu0 0
        %983 = vmatprep.mubr.bf16.mxu0 0
        %984 = vmatmul.mubr.bf16.gmra.mxu0 %v946
        %v985 = vpop.f32.mrf.mxu0
        %v986 = vadd.f32 0.0, %v985
        %v987 = vpop.f32.mrf.mxu0
        %v988 = vpop.f32.mrf.mxu0
        %v989 = vpop.f32.mrf.mxu0
        %990 = vdwg.mxu0
        %v991 = vpack.c.bf16 %v986, %v986
        %v993 = vunpack.c.l.b16 %v991
        %v994 = vpack.c.b16 %v993, %v993
        %995 = vrot.lane.b32.xlu0 %v994, 8
        %v996 = vpop.permute.xlu0 %995
        %vm998 = vcmask 126016
        %999 = vst.msk [vmem:[#allocation4] sm:$0xf] %vm998, %v996
        %v1000 = vld [vmem:[#allocation2] sm:$0xf]
        %1001 = vrot.lane.b32.xlu0 %v751, 112
        %v1002 = vpop.permute.xlu0 %1001
        %v1004 = vunpack.c.l.b16 %v1000
        %v1005 = vpack.c.b16 %v1004, %v1004
        %1006 = vrot.lane.b32.xlu0 %v1005, 112
        %v1007 = vpop.permute.xlu0 %1006
        %v1009 = vsel %vm762, %v1002, 0
        %v1012 = vsel %vm762, %v1007, 0
        %1014 = vmatprep.subr.bf16.mxu0 0
        %1015 = vmatpush1.bf16.xpose.msra.mxu0 0
        %1016 = vmatprep.subr.bf16.mxu0 0
        %1017 = vmatpush1.bf16.xpose.msra.mxu0 0
        %1018 = vmatprep.subr.bf16.mxu0 0
        %1019 = vmatpush1.bf16.xpose.msra.mxu0 0
        %1020 = vmatprep.subr.bf16.mxu0 0
        %1021 = vmatpush1.bf16.xpose.msra.mxu0 0
        %1022 = vmatprep.subr.bf16.mxu0 0
        %1023 = vmatpush1.bf16.xpose.msra.mxu0 0
        %1024 = vmatprep.subr.bf16.mxu0 0
        %1025 = vmatpush1.bf16.xpose.msra.mxu0 0
        %1026 = vmatprep.subr.bf16.mxu0 0
        %1027 = vmatpush1.bf16.xpose.msra.mxu0 0
        %1028 = vmatprep.subr.bf16.mxu0 0
        %1029 = vmatpush1.bf16.xpose.msra.mxu0 %v1012
        %1030 = vmatprep.subr.bf16.mxu0 0
        %1031 = vmatpush2.bf16.xpose.msra.mxu0 0
        %1032 = vmatprep.subr.bf16.mxu0 0
        %1033 = vmatpush2.bf16.xpose.msra.mxu0 0
        %1034 = vmatprep.subr.bf16.mxu0 0
        %1035 = vmatpush2.bf16.xpose.msra.mxu0 0
        %1036 = vmatprep.subr.bf16.mxu0 0
        %1037 = vmatpush2.bf16.xpose.msra.mxu0 0
        %1038 = vmatprep.subr.bf16.mxu0 0
        %1039 = vmatpush2.bf16.xpose.msra.mxu0 0
        %1040 = vmatprep.subr.bf16.mxu0 0
        %1041 = vmatpush2.bf16.xpose.msra.mxu0 0
        %1042 = vmatprep.subr.bf16.mxu0 0
        %1043 = vmatpush2.bf16.xpose.msra.mxu0 0
        %1044 = vmatprep.subr.bf16.mxu0 0
        %1045 = vmatpush2.bf16.xpose.msra.mxu0 0
        %1046 = vmatprep.mubr.bf16.mxu0 0
        %1047 = vmatmul.mubr.bf16.gmra.mxu0 %v1009
        %v1048 = vpop.f32.mrf.mxu0
        %v1049 = vadd.f32 %v760, %v1048
        %v1050 = vpop.f32.mrf.mxu0
        %v1051 = vpop.f32.mrf.mxu0
        %v1052 = vpop.f32.mrf.mxu0
        %1053 = vdwg.mxu0
        %v1054 = vsel %vm762, %v1049, -inf
        %1055 = vmax.xlane.f32.xlu0 %v1054
        %v1056 = vpop.xlane.xlu0 %1055
        %v1057 = vsub.f32 %v1049, %v1056
        %v1058 = vmul.f32 %v1057, 1.442695
        %v1059 = vpow.pop %v1058
        %v1060 = vsel %vm762, %v1059, 0.0
        %1061 = vadd.xlane.f32.xlu0 %v1060
        %v1062 = vpop.xlane.xlu0 %1061
        %v1063 = vrcp.pop %v1062
        %v1064 = vmul.f32 %v1059, %v1063
        %v1065 = vpack.c.bf16 %v1064, %v1064
        %v1066 = vld [vmem:[#allocation3] sm:$0xf]
        %v1068 = vunpack.c.l.b16 %v1066
        %v1069 = vpack.c.b16 %v1068, %v1068
        %1070 = vrot.lane.b32.xlu0 %v1069, 112
        %v1071 = vpop.permute.xlu0 %1070
        %v1073 = vsel %vm762, %v1065, 0
        %v1076 = vsel %vm825, %v1071, 0
        %1078 = vmatprep.subr.bf16.mxu0 0
        %1079 = vmatpush1.bf16.msra.mxu0 0
        %1080 = vmatprep.subr.bf16.mxu0 0
        %1081 = vmatpush1.bf16.msra.mxu0 0
        %1082 = vmatprep.subr.bf16.mxu0 0
        %1083 = vmatpush1.bf16.msra.mxu0 0
        %1084 = vmatprep.subr.bf16.mxu0 0
        %1085 = vmatpush1.bf16.msra.mxu0 0
        %1086 = vmatprep.subr.bf16.mxu0 0
        %1087 = vmatpush1.bf16.msra.mxu0 0
        %1088 = vmatprep.subr.bf16.mxu0 0
        %1089 = vmatpush1.bf16.msra.mxu0 0
        %1090 = vmatprep.subr.bf16.mxu0 0
        %1091 = vmatpush1.bf16.msra.mxu0 0
        %1092 = vmatprep.subr.bf16.mxu0 0
        %1093 = vmatpush1.bf16.msra.mxu0 %v1076
        %1094 = vmatprep.subr.bf16.mxu0 0
        %1095 = vmatpush2.bf16.msra.mxu0 0
        %1096 = vmatprep.subr.bf16.mxu0 0
        %1097 = vmatpush2.bf16.msra.mxu0 0
        %1098 = vmatprep.subr.bf16.mxu0 0
        %1099 = vmatpush2.bf16.msra.mxu0 0
        %1100 = vmatprep.subr.bf16.mxu0 0
        %1101 = vmatpush2.bf16.msra.mxu0 0
        %1102 = vmatprep.subr.bf16.mxu0 0
        %1103 = vmatpush2.bf16.msra.mxu0 0
        %1104 = vmatprep.subr.bf16.mxu0 0
        %1105 = vmatpush2.bf16.msra.mxu0 0
        %1106 = vmatprep.subr.bf16.mxu0 0
        %1107 = vmatpush2.bf16.msra.mxu0 0
        %1108 = vmatprep.subr.bf16.mxu0 0
        %1109 = vmatpush2.bf16.msra.mxu0 0
        %1110 = vmatprep.mubr.bf16.mxu0 0
        %1111 = vmatmul.mubr.bf16.gmra.mxu0 %v1073
        %v1112 = vpop.f32.mrf.mxu0
        %v1113 = vadd.f32 0.0, %v1112
        %v1114 = vpop.f32.mrf.mxu0
        %v1115 = vpop.f32.mrf.mxu0
        %v1116 = vpop.f32.mrf.mxu0
        %1117 = vdwg.mxu0
        %v1118 = vpack.c.bf16 %v1113, %v1113
        %v1120 = vunpack.c.l.b16 %v1118
        %v1121 = vpack.c.b16 %v1120, %v1120
        %1122 = vrot.lane.b32.xlu0 %v1121, 16
        %v1123 = vpop.permute.xlu0 %1122
        %vm1125 = vcmask 191616
        %1126 = vst.msk [vmem:[#allocation4] sm:$0xf] %vm1125, %v1123
        %v1127 = vld [vmem:[#allocation2] sm:$0xf]
        %1128 = vrot.lane.b32.xlu0 %v751, 104
        %v1129 = vpop.permute.xlu0 %1128
        %v1131 = vunpack.c.l.b16 %v1127
        %v1132 = vpack.c.b16 %v1131, %v1131
        %1133 = vrot.lane.b32.xlu0 %v1132, 104
        %v1134 = vpop.permute.xlu0 %1133
        %v1136 = vsel %vm762, %v1129, 0
        %v1139 = vsel %vm762, %v1134, 0
        %1141 = vmatprep.subr.bf16.mxu0 0
        %1142 = vmatpush1.bf16.xpose.msra.mxu0 0
        %1143 = vmatprep.subr.bf16.mxu0 0
        %1144 = vmatpush1.bf16.xpose.msra.mxu0 0
        %1145 = vmatprep.subr.bf16.mxu0 0
        %1146 = vmatpush1.bf16.xpose.msra.mxu0 0
        %1147 = vmatprep.subr.bf16.mxu0 0
        %1148 = vmatpush1.bf16.xpose.msra.mxu0 0
        %1149 = vmatprep.subr.bf16.mxu0 0
        %1150 = vmatpush1.bf16.xpose.msra.mxu0 0
        %1151 = vmatprep.subr.bf16.mxu0 0
        %1152 = vmatpush1.bf16.xpose.msra.mxu0 0
        %1153 = vmatprep.subr.bf16.mxu0 0
        %1154 = vmatpush1.bf16.xpose.msra.mxu0 0
        %1155 = vmatprep.subr.bf16.mxu0 0
        %1156 = vmatpush1.bf16.xpose.msra.mxu0 %v1139
        %1157 = vmatprep.subr.bf16.mxu0 0
        %1158 = vmatpush2.bf16.xpose.msra.mxu0 0
        %1159 = vmatprep.subr.bf16.mxu0 0
        %1160 = vmatpush2.bf16.xpose.msra.mxu0 0
        %1161 = vmatprep.subr.bf16.mxu0 0
        %1162 = vmatpush2.bf16.xpose.msra.mxu0 0
        %1163 = vmatprep.subr.bf16.mxu0 0
        %1164 = vmatpush2.bf16.xpose.msra.mxu0 0
        %1165 = vmatprep.subr.bf16.mxu0 0
        %1166 = vmatpush2.bf16.xpose.msra.mxu0 0
        %1167 = vmatprep.subr.bf16.mxu0 0
        %1168 = vmatpush2.bf16.xpose.msra.mxu0 0
        %1169 = vmatprep.subr.bf16.mxu0 0
        %1170 = vmatpush2.bf16.xpose.msra.mxu0 0
        %1171 = vmatprep.subr.bf16.mxu0 0
        %1172 = vmatpush2.bf16.xpose.msra.mxu0 0
        %1173 = vmatprep.mubr.bf16.mxu0 0
        %1174 = vmatmul.mubr.bf16.gmra.mxu0 %v1136
        %v1175 = vpop.f32.mrf.mxu0
        %v1176 = vadd.f32 %v760, %v1175
        %v1177 = vpop.f32.mrf.mxu0
        %v1178 = vpop.f32.mrf.mxu0
        %v1179 = vpop.f32.mrf.mxu0
        %1180 = vdwg.mxu0
        %v1181 = vsel %vm762, %v1176, -inf
        %1182 = vmax.xlane.f32.xlu0 %v1181
        %v1183 = vpop.xlane.xlu0 %1182
        %v1184 = vsub.f32 %v1176, %v1183
        %v1185 = vmul.f32 %v1184, 1.442695
        %v1186 = vpow.pop %v1185
        %v1187 = vsel %vm762, %v1186, 0.0
        %1188 = vadd.xlane.f32.xlu0 %v1187
        %v1189 = vpop.xlane.xlu0 %1188
        %v1190 = vrcp.pop %v1189
        %v1191 = vmul.f32 %v1186, %v1190
        %v1192 = vpack.c.bf16 %v1191, %v1191
        %v1193 = vld [vmem:[#allocation3] sm:$0xf]
        %v1195 = vunpack.c.l.b16 %v1193
        %v1196 = vpack.c.b16 %v1195, %v1195
        %1197 = vrot.lane.b32.xlu0 %v1196, 104
        %v1198 = vpop.permute.xlu0 %1197
        %v1200 = vsel %vm762, %v1192, 0
        %v1203 = vsel %vm825, %v1198, 0
        %1205 = vmatprep.subr.bf16.mxu0 0
        %1206 = vmatpush1.bf16.msra.mxu0 0
        %1207 = vmatprep.subr.bf16.mxu0 0
        %1208 = vmatpush1.bf16.msra.mxu0 0
        %1209 = vmatprep.subr.bf16.mxu0 0
        %1210 = vmatpush1.bf16.msra.mxu0 0
        %1211 = vmatprep.subr.bf16.mxu0 0
        %1212 = vmatpush1.bf16.msra.mxu0 0
        %1213 = vmatprep.subr.bf16.mxu0 0
        %1214 = vmatpush1.bf16.msra.mxu0 0
        %1215 = vmatprep.subr.bf16.mxu0 0
        %1216 = vmatpush1.bf16.msra.mxu0 0
        %1217 = vmatprep.subr.bf16.mxu0 0
        %1218 = vmatpush1.bf16.msra.mxu0 0
        %1219 = vmatprep.subr.bf16.mxu0 0
        %1220 = vmatpush1.bf16.msra.mxu0 %v1203
        %1221 = vmatprep.subr.bf16.mxu0 0
        %1222 = vmatpush2.bf16.msra.mxu0 0
        %1223 = vmatprep.subr.bf16.mxu0 0
        %1224 = vmatpush2.bf16.msra.mxu0 0
        %1225 = vmatprep.subr.bf16.mxu0 0
        %1226 = vmatpush2.bf16.msra.mxu0 0
        %1227 = vmatprep.subr.bf16.mxu0 0
        %1228 = vmatpush2.bf16.msra.mxu0 0
        %1229 = vmatprep.subr.bf16.mxu0 0
        %1230 = vmatpush2.bf16.msra.mxu0 0
        %1231 = vmatprep.subr.bf16.mxu0 0
        %1232 = vmatpush2.bf16.msra.mxu0 0
        %1233 = vmatprep.subr.bf16.mxu0 0
        %1234 = vmatpush2.bf16.msra.mxu0 0
        %1235 = vmatprep.subr.bf16.mxu0 0
        %1236 = vmatpush2.bf16.msra.mxu0 0
        %1237 = vmatprep.mubr.bf16.mxu0 0
        %1238 = vmatmul.mubr.bf16.gmra.mxu0 %v1200
        %v1239 = vpop.f32.mrf.mxu0
        %v1240 = vadd.f32 0.0, %v1239
        %v1241 = vpop.f32.mrf.mxu0
        %v1242 = vpop.f32.mrf.mxu0
        %v1243 = vpop.f32.mrf.mxu0
        %1244 = vdwg.mxu0
        %v1245 = vpack.c.bf16 %v1240, %v1240
        %v1247 = vunpack.c.l.b16 %v1245
        %v1248 = vpack.c.b16 %v1247, %v1247
        %1249 = vrot.lane.b32.xlu0 %v1248, 24
        %v1250 = vpop.permute.xlu0 %1249
        %vm1252 = vcmask 257216
        %1253 = vst.msk [vmem:[#allocation4] sm:$0xf] %vm1252, %v1250
        %v1254 = vld [vmem:[#allocation4] sm:$0xf]
        %v1255 = vld [vmem:[#allocation14] sm:$0xf]
        %v1256 = vld [vmem:[#allocation14 + $0x4] sm:$0xf]
        %v1257 = vld [vmem:[#allocation14 + $0x8] sm:$0xf]
        %v1258 = vld [vmem:[#allocation14 + $0xc] sm:$0xf]
        %v1259 = vld [vmem:[%s9] sm:$0x1]
        %v1261 = vlaneseq
        %v1262 = vshrl.u32 %v1261, 7
        %v1263 = vsub.s32 0, %v1262
        %v1264 = vrot.slane %v1259, %v1263
        %v1270 = vunpack.c.l.b16 %v1255
        %v1271 = vunpack.c.l.b16 %v1256
        %v1272 = vunpack.c.l.b16 %v1257
        %v1273 = vunpack.c.l.b16 %v1258
        %v1274 = vpack.c.b16 %v1271, %v1270
        %v1275 = vpack.c.b16 %v1273, %v1272
        %v1279 = vsel %vm707, %v1254, 0
        %1281 = vmatprep.subr.bf16.mxu0 0
        %1282 = vmatpush1.bf16.msra.mxu0 0
        %1283 = vmatprep.subr.bf16.mxu0 0
        %1284 = vmatpush1.bf16.msra.mxu0 0
        %1285 = vmatprep.subr.bf16.mxu0 0
        %1286 = vmatpush1.bf16.msra.mxu0 0
        %1287 = vmatprep.subr.bf16.mxu0 0
        %1288 = vmatpush1.bf16.msra.mxu0 0
        %1289 = vmatprep.subr.bf16.mxu0 0
        %1290 = vmatpush1.bf16.msra.mxu0 0
        %1291 = vmatprep.subr.bf16.mxu0 0
        %1292 = vmatpush1.bf16.msra.mxu0 0
        %1293 = vmatprep.subr.bf16.mxu0 0
        %1294 = vmatpush1.bf16.msra.mxu0 %v1275
        %1295 = vmatprep.subr.bf16.mxu0 0
        %1296 = vmatpush1.bf16.msra.mxu0 %v1274
        %1297 = vmatprep.subr.bf16.mxu0 0
        %1298 = vmatpush2.bf16.msra.mxu0 0
        %1299 = vmatprep.subr.bf16.mxu0 0
        %1300 = vmatpush2.bf16.msra.mxu0 0
        %1301 = vmatprep.subr.bf16.mxu0 0
        %1302 = vmatpush2.bf16.msra.mxu0 0
        %1303 = vmatprep.subr.bf16.mxu0 0
        %1304 = vmatpush2.bf16.msra.mxu0 0
        %1305 = vmatprep.subr.bf16.mxu0 0
        %1306 = vmatpush2.bf16.msra.mxu0 0
        %1307 = vmatprep.subr.bf16.mxu0 0
        %1308 = vmatpush2.bf16.msra.mxu0 0
        %1309 = vmatprep.subr.bf16.mxu0 0
        %1310 = vmatpush2.bf16.msra.mxu0 0
        %1311 = vmatprep.subr.bf16.mxu0 0
        %1312 = vmatpush2.bf16.msra.mxu0 0
        %1313 = vmatprep.mubr.bf16.mxu0 0
        %1314 = vmatmul.mubr.bf16.gmra.mxu0 %v1279
        %v1315 = vpop.f32.mrf.mxu0
        %v1316 = vadd.f32 %v1264, %v1315
        %v1317 = vpop.f32.mrf.mxu0
        %v1318 = vpop.f32.mrf.mxu0
        %v1319 = vpop.f32.mrf.mxu0
        %1320 = vdwg.mxu0
        %v1321 = vadd.f32 %v1316, %v683
        %v1322 = vld [vmem:[%s10] sm:$0x1]
        %v1323 = vld [vmem:[%s11] sm:$0x1]
        %v1324 = vsel %vm707, %v1321, 0.0
        %1325 = vadd.xlane.f32.xlu0 %v1324
        %v1326 = vpop.xlane.xlu0 %1325
        %v1327 = vrcp.pop 32.0
        %v1328 = vmul.f32 %v1326, %v1327
        %v1329 = vsub.f32 %v1321, %v1328
        %v1330 = vmul.f32 %v1329, %v1329
        %v1331 = vsel %vm707, %v1330, 0.0
        %1332 = vadd.xlane.f32.xlu0 %v1331
        %v1333 = vpop.xlane.xlu0 %1332
        %v1334 = vmul.f32 %v1333, %v1327
        %v1335 = vadd.f32 %v1334, 1e-06
        %v1336 = vrsqrt.pop %v1335
        %v1337 = vmul.f32 %v1329, %v1336
        %v1339 = vlaneseq
        %v1340 = vshrl.u32 %v1339, 7
        %v1341 = vsub.s32 0, %v1340
        %v1342 = vrot.slane %v1322, %v1341
        %v1344 = vmul.f32 %v1337, %v1342
        %v1346 = vlaneseq
        %v1347 = vshrl.u32 %v1346, 7
        %v1348 = vsub.s32 0, %v1347
        %v1349 = vrot.slane %v1323, %v1348
        %v1351 = vadd.f32 %v1344, %v1349
        %v1352 = vpack.c.bf16 %v1351, %v1351
        %vm1353 = vcmask 257024
        %1354 = vst.msk [vmem:[%s540] sm:$0xf] %vm1353, %v1352
        %s1355 = sand.u32 %s320, 1
        %s1356 = scalar_lea.sflag [#allocation7], %s1355
        %s1357 = sand.u32 %s320, 1
        %s1358 = smul.addr %s1357, 4
        %s1359 = scalar_lea.vmem [#allocation16], %s1358
        // Predicated region
        $region97: #{tpu_custom_call.1} parent=67 // pred_check
          %p1360 = pneg %p330
        $region98: #{tpu_custom_call.1} parent=67 // pred_check_branch
          %1362 = sbr.rel (%p1360) target = $region100
        $region99: #{tpu_custom_call.1} parent=67 // pred_region
          %s1364 = ssub.s32 64, 64
          %1365 = vsyncadd %s1356, %s1364
          %s1366 = sadd.s32 %s39, %s38
          %s1367 = smul.addr %s1366, 64
          %s1368 = scalar_lea.hbm %s12, %s1367
          %s1370 = sshll.u32 %s1359, 4
          %s1371 = int_to_ptr.vmem [resolvable:$true] %s1370
          %1373 = dma.vmem_to_hbm [thread:$0]  %s1371, 64, %s1368, %s1356
        $region100: #{tpu_custom_call.1} parent=67 // pred_fallthru
          _
      $region68: #{tpu_custom_call.1} parent=5 // pred_fallthru
        _
      %p1374 = scmp.le.s32.totalorder 2, %s29
      // Predicated region
      $region101: #{tpu_custom_call.1} parent=5 // pred_check
        %p1375 = pneg %p1374
      $region102: #{tpu_custom_call.1} parent=5 // pred_check_branch
        %1377 = sbr.rel (%p1375) target = $region104
      $region103: #{tpu_custom_call.1} parent=5 // pred_region
        %s1378 = ssub.s32 %s29, 2
        // Predicated region
        $region105: #{tpu_custom_call.1} parent=103 // pred_check
          %p1379 = pneg %p336
        $region106: #{tpu_custom_call.1} parent=103 // pred_check_branch
          %1381 = sbr.rel (%p1379) target = $region108
        $region107: #{tpu_custom_call.1} parent=103 // pred_region
          %s1382 = sand.u32 %s321, 1
          %s1383 = scalar_lea.sflag [#allocation7], %s1382
          %s1384 = sand.u32 %s321, 1
          %s1385 = smul.addr %s1384, 4
          %s1386 = scalar_lea.vmem [#allocation16], %s1385
          %1387 = dma.done %s1383, 64
        $region108: #{tpu_custom_call.1} parent=103 // pred_fallthru
          _
      $region104: #{tpu_custom_call.1} parent=5 // pred_fallthru
        _
    $region6: #{tpu_custom_call.1} parent=1 // loop_footer
      %s33 = sadd.s32 1, %s29
    $region7: #{tpu_custom_call.1} parent=1 // loop_footer_branch
      %28 = sbr.rel target = $region3
    $region8: #{tpu_custom_call.1} parent=1 // loop_exit
      _
    %1388 = vsyncpa [#allocation6], 1
    %s1389 = scalar_lea.sflag [#allocation6], 1
    %1390 = vsyncpa %s1389, 1
    %1391 = vsyncpa [#allocation9], 1
    %s1392 = scalar_lea.sflag [#allocation9], 1
    %1393 = vsyncpa %s1392, 1
    %1394 = vsyncpa [#allocation12], 1
    %1395 = vsyncpa [#allocation15], 1
    %1396 = vsyncpa [#allocation7], 1
    %s1397 = scalar_lea.sflag [#allocation7], 1
    %1398 = vsyncpa %s1397, 1

</llo_original>
